<compile_context>
chip_gen: v7x
topology: tpu7x:2x2x1
jax: 0.10.0
libtpu: 0.0.40
codegen_flags: <defaults>
</compile_context>

<pallas_src>
import functools

import jax
import jax.numpy as jnp
from jax import lax
from jax.experimental import pallas as pl
from jax.experimental.pallas import tpu as pltpu

_SUBLANE = 8
_LANE = 128


def _round_up(x, m):
    return -(-x // m) * m


def _tpu_generation():
    """Returns (mxu_row_cap, vmem_capacity_bytes, two_tensorcores)."""
    kind = ""
    try:
        kind = jax.devices()[0].device_kind.lower()
    except Exception:
        pass
    two_cores = "v7" in kind                       # v7x: 2 TCs / chip
    mxu_cap = 256 if ("v6" in kind or "v7" in kind) else 128
    vmem_cap = None
    try:
        vmem_cap = int(getattr(pltpu.get_tpu_info(), "vmem_capacity_bytes"))
    except Exception:
        vmem_cap = None
    if not vmem_cap or vmem_cap <= 0:
        vmem_cap = (64 << 20) if two_cores else (128 << 20)
    return mxu_cap, vmem_cap, two_cores


def _vmem_estimate(bt, chunk, in_size, hidden, four_h, out_pad,
                   compute_itemsize, scratch_itemsize):
    """Rough VMEM footprint (lane/sublane-padded) for one batch/seq tile."""
    in_l = _round_up(in_size, _LANE)
    h_l = _round_up(hidden, _LANE)
    fh_l = _round_up(four_h, _LANE)
    in_s = _round_up(in_size, _SUBLANE)
    h_s = _round_up(hidden, _SUBLANE)
    return (
        2 * chunk * bt * in_l * compute_itemsize                  # x block (double buf)
        + 2 * (in_s * fh_l + h_s * fh_l + h_s * out_pad) * compute_itemsize  # weights
        + 2 * _SUBLANE * (fh_l + out_pad) * 4                     # biases (f32)
        + 2 * bt * out_pad * 4                                    # y block (double buf)
        + chunk * bt * fh_l * scratch_itemsize                    # xw scratch
        + 2 * bt * h_l * 4                                        # h / c state scratch
    )


def _textsubnet_kernel(x_ref, wih_ref, whh_ref, b_ref, wl_ref, bl_ref,
                       y_ref, xw_scr, h_scr, c_scr, *,
                       seq_len, mask_tail, unroll):
    """One (batch-tile, seq-chunk) grid point of the TextSubNet forward pass.

    x_ref   : (chunk, bt, in_size)  time-major input chunk      (compute dtype)
    wih_ref : (in_size, 4*hidden)   W_ih^T                      (compute dtype)
    whh_ref : (hidden, 4*hidden)    W_hh^T                      (compute dtype)
    b_ref   : (1, 4*hidden)         b_ih + b_hh                 (f32)
    wl_ref  : (hidden, out_pad)     W_lin^T, lane-padded        (compute dtype)
    bl_ref  : (1, out_pad)          b_lin, lane-padded          (f32)
    y_ref   : (bt, out_pad)         output tile                 (f32)
    xw_scr  : (chunk*bt, 4*hidden)  hoisted x-projection        (compute dtype)
    h_scr   : (bt, hidden)          recurrent state across seq chunks (f32)
    c_scr   : (bt, hidden)          recurrent state across seq chunks (f32)
    """
    chunk_len, bt, in_size = x_ref.shape
    hidden, four_h = whh_ref.shape
    s = pl.program_id(1)

    # ---- Phase 1: hoisted input projection for this chunk — ONE MXU matmul
    # with M = chunk*bt instead of chunk tiny M=bt matmuls in the recurrence.
    x2d = x_ref[...].reshape(chunk_len * bt, in_size)
    xw = jnp.dot(x2d, wih_ref[...], preferred_element_type=jnp.float32) + b_ref[...]
    xw_scr[...] = xw.astype(xw_scr.dtype)

    # ---- Init recurrent state at the first chunk of each batch tile.
    @pl.when(s == 0)
    def _():
        h_scr[...] = jnp.zeros_like(h_scr)
        c_scr[...] = jnp.zeros_like(c_scr)

    # ---- Phase 2: serial recurrence.  Loop-invariant weight and g-gate lane
    # mask loaded/built once; h/c live in registers (fori_loop carry).
    whh = whh_ref[...]
    lane = lax.broadcasted_iota(jnp.int32, (bt, four_h), 1)
    g_mask = (lane >= 2 * hidden) & (lane < 3 * hidden)

    def step(tt, carry):
        h, c = carry
        row = pl.multiple_of(tt * bt, bt)              # sublane-aligned dense load
        gates = xw_scr[pl.ds(row, bt), :].astype(jnp.float32) + jnp.dot(
            h.astype(whh.dtype), whh, preferred_element_type=jnp.float32)

        # Two full-width EUP ops + one VPU select instead of four narrow
        # (32-lane) transcendental calls on sub-vreg slices.
        sig = jax.nn.sigmoid(gates)
        tnh = jnp.tanh(gates)
        act = jnp.where(g_mask, tnh, sig)

        i_g = act[:, 0 * hidden:1 * hidden]
        f_g = act[:, 1 * hidden:2 * hidden]
        g_g = act[:, 2 * hidden:3 * hidden]
        o_g = act[:, 3 * hidden:4 * hidden]

        c_new = f_g * c + i_g * g_g
        h_new = o_g * jnp.tanh(c_new)
        if mask_tail:
            valid = (s * chunk_len + tt) < seq_len     # ignore zero-padded steps
            h_new = jnp.where(valid, h_new, h)
            c_new = jnp.where(valid, c_new, c)
        return h_new, c_new

    h_f, c_f = lax.fori_loop(0, chunk_len, step, (h_scr[...], c_scr[...]),
                             unroll=unroll)
    h_scr[...] = h_f
    c_scr[...] = c_f

    # TODO(synk): nn.Dropout(0.2) is identity in eval mode; training-mode
    # stochastic masking (pltpu.prng_*) is intentionally not applied here.

    # ---- Phase 3: final Linear, lane-dense (bt, out_pad) store, last chunk only.
    @pl.when(s == pl.num_programs(1) - 1)
    def _():
        wl = wl_ref[...]
        y_ref[...] = (jnp.dot(h_f.astype(wl.dtype), wl,
                              preferred_element_type=jnp.float32)
                      + bl_ref[...]).astype(y_ref.dtype)


def text_subnet_forward(x, params, compute_dtype=jnp.bfloat16):
    """TextSubNet forward.  x: (batch, seq, in_size) f32, batch_first.

    compute_dtype: dtype fed to the MXU for x / weights / the xw scratch
    (bf16 by default); accumulation, gates, and the h/c state stay f32.
    Note this is an explicit mixed-precision choice — pass jnp.float32 for
    bit-closer parity with the PyTorch f32 LSTM.
    """
    batch, seq_len, in_size = x.shape
    four_h = params["w_hh"].shape[0]              # (4H, H) PyTorch layout
    hidden = four_h // 4
    out_size = params["w_lin"].shape[0]

    mxu_cap, vmem_cap, two_cores = _tpu_generation()
    # Stay well below physical VMEM (Pallas needs bookkeeping headroom):
    # ~54 MiB on 64-MiB v7x cores, ~108 MiB on 128-MiB v5e/v6e cores.
    vmem_ceiling = int(vmem_cap) * 85 // 100
    vmem_budget = vmem_ceiling - (2 << 20)

    batch_pad = _round_up(batch, _SUBLANE)
    out_pad = _round_up(out_size, _LANE)
    c_itemsize = jnp.dtype(compute_dtype).itemsize

    # --- batch tile: fill the MXU M rows (256 on v6e/v7x, 128 on v5e), but on
    # v7x keep at least two tiles so both TensorCores get work.
    bt = min(batch_pad, mxu_cap)
    if two_cores and batch_pad >= 2 * _SUBLANE:
        bt = min(bt, _round_up(-(-batch_pad // 2), _SUBLANE))
    bt = _round_up(bt, _SUBLANE)

    def fits(bt_, chunk_):
        return _vmem_estimate(bt_, chunk_, in_size, hidden, four_h, out_pad,
                              c_itemsize, c_itemsize) <= vmem_budget

    # --- seq chunk: keep the whole sequence resident when it fits; otherwise
    # tile it over an "arbitrary" grid axis so VMEM stays bounded and the next
    # chunk's x DMA overlaps the current chunk's recurrence.
    chunk = seq_len
    while not fits(bt, chunk) and chunk > 8:
        chunk = -(-chunk // 2)
    while not fits(bt, chunk) and bt > _SUBLANE:
        bt = _round_up(max(_SUBLANE, bt // 2), _SUBLANE)

    n_chunks = -(-seq_len // chunk)
    seq_pad = n_chunks * chunk
    batch_pad = _round_up(batch_pad, bt)
    nbt = batch_pad // bt
    mask_tail = seq_pad != seq_len

    # Time-major, padded layout: the (chunk, bt, in) block for grid point
    # (i, s) is a contiguous box, so per-timestep gate rows inside the kernel
    # are dense sublane-aligned loads.  This is one small XLA transpose/pad
    # over x (the smallest tensor); the kernel reads x exactly once.
    x_tm = jnp.transpose(x, (1, 0, 2))
    x_tm = jnp.pad(x_tm, ((0, seq_pad - seq_len), (0, batch_pad - batch), (0, 0)))
    x_tm = x_tm.astype(compute_dtype)

    # Pre-transpose weights so the kernel does plain (M,K)x(K,N) matmuls.
    wih_t = params["w_ih"].T.astype(compute_dtype)          # (in, 4H)
    whh_t = params["w_hh"].T.astype(compute_dtype)          # (H, 4H)
    b = (params["b_ih"] + params["b_hh"]).reshape(1, four_h).astype(jnp.float32)
    wl_t = params["w_lin"].T.astype(compute_dtype)          # (H, out)
    bl = params["b_lin"].reshape(1, out_size).astype(jnp.float32)
    if out_pad != out_size:                                  # lane-dense output head
        wl_t = jnp.pad(wl_t, ((0, 0), (0, out_pad - out_size)))
        bl = jnp.pad(bl, ((0, 0), (0, out_pad - out_size)))

    # Fully unroll short chunks; modest unroll factor for long ones.
    unroll = True if chunk <= 16 else 8

    est = _vmem_estimate(bt, chunk, in_size, hidden, four_h, out_pad,
                         c_itemsize, c_itemsize)
    vmem_limit = int(min(vmem_ceiling, max(2 * est, 4 << 20)))

    kernel = functools.partial(_textsubnet_kernel, seq_len=seq_len,
                               mask_tail=mask_tail, unroll=unroll)

    # NOTE: the constant-index weight/bias blocks are tiny at these dims, so
    # default double-buffering is kept (pipeline_mode pinning not worth the
    # compile-surface risk here).
    y_pad = pl.pallas_call(
        kernel,
        out_shape=jax.ShapeDtypeStruct((batch_pad, out_pad), jnp.float32),
        grid=(nbt, n_chunks),
        in_specs=[
            pl.BlockSpec((chunk, bt, in_size), lambda i, s: (s, i, 0)),
            pl.BlockSpec((in_size, four_h), lambda i, s: (0, 0)),
            pl.BlockSpec((hidden, four_h), lambda i, s: (0, 0)),
            pl.BlockSpec((1, four_h), lambda i, s: (0, 0)),
            pl.BlockSpec((hidden, out_pad), lambda i, s: (0, 0)),
            pl.BlockSpec((1, out_pad), lambda i, s: (0, 0)),
        ],
        out_specs=pl.BlockSpec((bt, out_pad), lambda i, s: (i, 0)),
        scratch_shapes=[
            pltpu.VMEM((chunk * bt, four_h), compute_dtype),   # xw (compute dtype)
            pltpu.VMEM((bt, hidden), jnp.float32),             # h carry across chunks
            pltpu.VMEM((bt, hidden), jnp.float32),             # c carry across chunks
        ],
        compiler_params=pltpu.CompilerParams(
            dimension_semantics=("parallel", "arbitrary"),
            vmem_limit_bytes=vmem_limit,
        ),
    )(x_tm, wih_t, whh_t, b, wl_t, bl)

    return y_pad[:batch, :out_size]


def init_params(key, in_size, hidden, out_size):
    """Deterministic synthetic parameters with PyTorch-LSTM shapes."""
    ks = jax.random.split(key, 6)
    scale = 0.1
    return {
        "w_ih": scale * jax.random.normal(ks[0], (4 * hidden, in_size), jnp.float32),
        "w_hh": scale * jax.random.normal(ks[1], (4 * hidden, hidden), jnp.float32),
        "b_ih": scale * jax.random.normal(ks[2], (4 * hidden,), jnp.float32),
        "b_hh": scale * jax.random.normal(ks[3], (4 * hidden,), jnp.float32),
        "w_lin": scale * jax.random.normal(ks[4], (out_size, hidden), jnp.float32),
        "b_lin": scale * jax.random.normal(ks[5], (out_size,), jnp.float32),
    }


def _reference_forward(x, params):
    """Pure-JAX f32 reference of the same forward pass."""
    batch, seq_len, _ = x.shape
    hidden = params["w_hh"].shape[1]
    h = jnp.zeros((batch, hidden), jnp.float32)
    c = jnp.zeros((batch, hidden), jnp.float32)
    for t in range(seq_len):
        gates = (x[:, t, :] @ params["w_ih"].T + params["b_ih"]
                 + h @ params["w_hh"].T + params["b_hh"])
        i_g = jax.nn.sigmoid(gates[:, 0 * hidden:1 * hidden])
        f_g = jax.nn.sigmoid(gates[:, 1 * hidden:2 * hidden])
        g_g = jnp.tanh(gates[:, 2 * hidden:3 * hidden])
        o_g = jax.nn.sigmoid(gates[:, 3 * hidden:4 * hidden])
        c = f_g * c + i_g * g_g
        h = o_g * jnp.tanh(c)
    return h @ params["w_lin"].T + params["b_lin"]


if __name__ == "__main__":
    batch, seq_len, in_size, hidden, out_size = 2, 8, 32, 32, 16

    key = jax.random.PRNGKey(0)
    kx, kp = jax.random.split(key)
    x = jax.random.normal(kx, (batch, seq_len, in_size), jnp.float32)
    params = init_params(kp, in_size, hidden, out_size)

    y_ref = _reference_forward(x, params)

    # Exact-precision path (f32 into the MXU + f32 scratch): tight check.
    y_f32 = jax.block_until_ready(
        text_subnet_forward(x, params, compute_dtype=jnp.float32))
    assert y_f32.shape == (batch, out_size)
    assert jnp.allclose(y_f32, y_ref, atol=1e-3, rtol=1e-3)

    # Fast path (bf16 x/weights/xw-scratch, f32 accumulation + f32 h/c state).
    y_bf16 = jax.block_until_ready(
        text_subnet_forward(x, params, compute_dtype=jnp.bfloat16))
    assert y_bf16.shape == (batch, out_size)
    assert jnp.allclose(y_bf16, y_ref, atol=1e-1, rtol=1e-1)

    print("KERNEL_OK")
</pallas_src>

<mosaic_0001>
module attributes {stable_mosaic.version = 11 : i64} {
  func.func @_textsubnet_kernel(%arg0: i32, %arg1: i32, %arg2: memref<8x8x32xf32, #tpu.memory_space<vmem>>, %arg3: memref<32x128xf32, #tpu.memory_space<vmem>>, %arg4: memref<32x128xf32, #tpu.memory_space<vmem>>, %arg5: memref<1x128xf32, #tpu.memory_space<vmem>>, %arg6: memref<32x128xf32, #tpu.memory_space<vmem>>, %arg7: memref<1x128xf32, #tpu.memory_space<vmem>>, %arg8: memref<8x128xf32, #tpu.memory_space<vmem>>, %arg9: memref<64x128xf32, #tpu.memory_space<vmem>>, %arg10: memref<8x32xf32, #tpu.memory_space<vmem>>, %arg11: memref<8x32xf32, #tpu.memory_space<vmem>>) attributes {dimension_semantics = [#tpu.dimension_semantics<parallel>, #tpu.dimension_semantics<arbitrary>], iteration_bounds = array<i64: 1, 1>, scalar_prefetch = 0 : i64, scratch_operands = 3 : i64, tpu.core_type = #tpu.core_type<tc>, window_params = [{transform_indices = @transform_0, window_bounds = array<i64: 8, 8, 32>}, {pipeline_mode = #tpu.pipeline_mode<synchronous>, transform_indices = @transform_1, window_bounds = array<i64: 32, 128>}, {pipeline_mode = #tpu.pipeline_mode<synchronous>, transform_indices = @transform_2, window_bounds = array<i64: 32, 128>}, {pipeline_mode = #tpu.pipeline_mode<synchronous>, transform_indices = @transform_3, window_bounds = array<i64: 1, 128>}, {pipeline_mode = #tpu.pipeline_mode<synchronous>, transform_indices = @transform_4, window_bounds = array<i64: 32, 128>}, {pipeline_mode = #tpu.pipeline_mode<synchronous>, transform_indices = @transform_5, window_bounds = array<i64: 1, 128>}, {transform_indices = @transform_6, window_bounds = array<i64: 8, 128>}]} {
    %c0 = arith.constant 0 : index
    %c0_0 = arith.constant 0 : index
    %c0_1 = arith.constant 0 : index
    %0 = vector.load %arg2[%c0, %c0_0, %c0_1] : memref<8x8x32xf32, #tpu.memory_space<vmem>>, vector<8x8x32xf32>
    %1 = vector.shape_cast %0 : vector<8x8x32xf32> to vector<64x32xf32>
    %c0_2 = arith.constant 0 : index
    %c0_3 = arith.constant 0 : index
    %2 = vector.load %arg3[%c0_2, %c0_3] : memref<32x128xf32, #tpu.memory_space<vmem>>, vector<32x128xf32>
    %cst = arith.constant dense<0.000000e+00> : vector<64x128xf32>
    %3 = tpu.matmul %1, %2, %cst {dimension_numbers = #tpu.dot_dimension_numbers<[1], [0], [0], [1], [0, 0, 1, 1], [], []>} : vector<64x32xf32>, vector<32x128xf32>, vector<64x128xf32> -> vector<64x128xf32>
    %c0_4 = arith.constant 0 : index
    %c0_5 = arith.constant 0 : index
    %4 = vector.load %arg5[%c0_4, %c0_5] : memref<1x128xf32, #tpu.memory_space<vmem>>, vector<1x128xf32>
    %5 = vector.broadcast %4 : vector<1x128xf32> to vector<64x128xf32>
    %6 = arith.addf %3, %5 : vector<64x128xf32>
    %c0_6 = arith.constant 0 : index
    %c0_7 = arith.constant 0 : index
    %7 = vector.load %arg9[%c0_6, %c0_7] : memref<64x128xf32, #tpu.memory_space<vmem>>, vector<64x128xf32>
    tpu.vector_store %arg9[%c0_6, %c0_7], %6 {strides = array<i32>} : memref<64x128xf32, #tpu.memory_space<vmem>>, vector<64x128xf32>,
    %c0_i32 = arith.constant 0 : i32
    %8 = arith.cmpi eq, %arg1, %c0_i32 : i32
    %9 = arith.extui %8 : i1 to i32
    %c0_i32_8 = arith.constant 0 : i32
    %10 = arith.cmpi ne, %9, %c0_i32_8 : i32
    scf.if %10 {
      %cst_54 = arith.constant 0.000000e+00 : f32
      %201 = vector.broadcast %cst_54 : f32 to vector<8x32xf32>
      %c0_55 = arith.constant 0 : index
      %c0_56 = arith.constant 0 : index
      %202 = vector.load %arg10[%c0_55, %c0_56] : memref<8x32xf32, #tpu.memory_space<vmem>>, vector<8x32xf32>
      tpu.vector_store %arg10[%c0_55, %c0_56], %201 {strides = array<i32>} : memref<8x32xf32, #tpu.memory_space<vmem>>, vector<8x32xf32>,
      %cst_57 = arith.constant 0.000000e+00 : f32
      %203 = vector.broadcast %cst_57 : f32 to vector<8x32xf32>
      %c0_58 = arith.constant 0 : index
      %c0_59 = arith.constant 0 : index
      %204 = vector.load %arg11[%c0_58, %c0_59] : memref<8x32xf32, #tpu.memory_space<vmem>>, vector<8x32xf32>
      tpu.vector_store %arg11[%c0_58, %c0_59], %203 {strides = array<i32>} : memref<8x32xf32, #tpu.memory_space<vmem>>, vector<8x32xf32>,
    } else {
    }
    %c0_9 = arith.constant 0 : index
    %c0_10 = arith.constant 0 : index
    %11 = vector.load %arg4[%c0_9, %c0_10] : memref<32x128xf32, #tpu.memory_space<vmem>>, vector<32x128xf32>
    %12 = tpu.iota {dimensions = array<i32: 1>} : vector<8x128xi32>
    %c64_i32 = arith.constant 64 : i32
    %13 = vector.broadcast %c64_i32 : i32 to vector<8x128xi32>
    %14 = arith.cmpi sge, %12, %13 : vector<8x128xi32>
    %c96_i32 = arith.constant 96 : i32
    %15 = vector.broadcast %c96_i32 : i32 to vector<8x128xi32>
    %16 = arith.cmpi slt, %12, %15 : vector<8x128xi32>
    %17 = arith.andi %14, %16 : vector<8x128xi1>
    %c0_11 = arith.constant 0 : index
    %c0_12 = arith.constant 0 : index
    %18 = vector.load %arg10[%c0_11, %c0_12] : memref<8x32xf32, #tpu.memory_space<vmem>>, vector<8x32xf32>
    %c0_13 = arith.constant 0 : index
    %c0_14 = arith.constant 0 : index
    %19 = vector.load %arg11[%c0_13, %c0_14] : memref<8x32xf32, #tpu.memory_space<vmem>>, vector<8x32xf32>
    %c0_i32_15 = arith.constant 0 : i32
    %c8_i32 = arith.constant 8 : i32
    %20 = arith.muli %c0_i32_15, %c8_i32 : i32
    %21 = tpu.assume_multiple %20, 8 : i32
    %22 = arith.index_cast %21 : i32 to index
    %c0_16 = arith.constant 0 : index
    %23 = vector.load %arg9[%22, %c0_16] : memref<64x128xf32, #tpu.memory_space<vmem>>, vector<8x128xf32>
    %cst_17 = arith.constant dense<0.000000e+00> : vector<8x128xf32>
    %24 = tpu.matmul %18, %11, %cst_17 {dimension_numbers = #tpu.dot_dimension_numbers<[1], [0], [0], [1], [0, 0, 1, 1], [], []>} : vector<8x32xf32>, vector<32x128xf32>, vector<8x128xf32> -> vector<8x128xf32>
    %25 = arith.addf %23, %24 : vector<8x128xf32>
    %26 = arith.negf %25 : vector<8x128xf32>
    %27 = math.exp %26 : vector<8x128xf32>
    %cst_18 = arith.constant 1.000000e+00 : f32
    %28 = vector.broadcast %cst_18 : f32 to vector<8x128xf32>
    %29 = arith.addf %28, %27 : vector<8x128xf32>
    %30 = arith.divf %28, %29 : vector<8x128xf32>
    %31 = math.tanh %25 : vector<8x128xf32>
    %32 = arith.select %17, %31, %30 : vector<8x128xi1>, vector<8x128xf32>
    %33 = vector.extract_strided_slice %32 {offsets = [0, 0], sizes = [8, 32], strides = [1, 1]} : vector<8x128xf32> to vector<8x32xf32>
    %34 = vector.extract_strided_slice %32 {offsets = [0, 32], sizes = [8, 32], strides = [1, 1]} : vector<8x128xf32> to vector<8x32xf32>
    %35 = vector.extract_strided_slice %32 {offsets = [0, 64], sizes = [8, 32], strides = [1, 1]} : vector<8x128xf32> to vector<8x32xf32>
    %36 = vector.extract_strided_slice %32 {offsets = [0, 96], sizes = [8, 32], strides = [1, 1]} : vector<8x128xf32> to vector<8x32xf32>
    %37 = arith.mulf %34, %19 : vector<8x32xf32>
    %38 = arith.mulf %33, %35 : vector<8x32xf32>
    %39 = arith.addf %37, %38 : vector<8x32xf32>
    %40 = math.tanh %39 : vector<8x32xf32>
    %41 = arith.mulf %36, %40 : vector<8x32xf32>
    %c1_i32 = arith.constant 1 : i32
    %c8_i32_19 = arith.constant 8 : i32
    %42 = arith.muli %c1_i32, %c8_i32_19 : i32
    %43 = tpu.assume_multiple %42, 8 : i32
    %44 = arith.index_cast %43 : i32 to index
    %c0_20 = arith.constant 0 : index
    %45 = vector.load %arg9[%44, %c0_20] : memref<64x128xf32, #tpu.memory_space<vmem>>, vector<8x128xf32>
    %cst_21 = arith.constant dense<0.000000e+00> : vector<8x128xf32>
    %46 = tpu.matmul %41, %11, %cst_21 {dimension_numbers = #tpu.dot_dimension_numbers<[1], [0], [0], [1], [0, 0, 1, 1], [], []>} : vector<8x32xf32>, vector<32x128xf32>, vector<8x128xf32> -> vector<8x128xf32>
    %47 = arith.addf %45, %46 : vector<8x128xf32>
    %48 = arith.negf %47 : vector<8x128xf32>
    %49 = math.exp %48 : vector<8x128xf32>
    %cst_22 = arith.constant 1.000000e+00 : f32
    %50 = vector.broadcast %cst_22 : f32 to vector<8x128xf32>
    %51 = arith.addf %50, %49 : vector<8x128xf32>
    %52 = arith.divf %50, %51 : vector<8x128xf32>
    %53 = math.tanh %47 : vector<8x128xf32>
    %54 = arith.select %17, %53, %52 : vector<8x128xi1>, vector<8x128xf32>
    %55 = vector.extract_strided_slice %54 {offsets = [0, 0], sizes = [8, 32], strides = [1, 1]} : vector<8x128xf32> to vector<8x32xf32>
    %56 = vector.extract_strided_slice %54 {offsets = [0, 32], sizes = [8, 32], strides = [1, 1]} : vector<8x128xf32> to vector<8x32xf32>
    %57 = vector.extract_strided_slice %54 {offsets = [0, 64], sizes = [8, 32], strides = [1, 1]} : vector<8x128xf32> to vector<8x32xf32>
    %58 = vector.extract_strided_slice %54 {offsets = [0, 96], sizes = [8, 32], strides = [1, 1]} : vector<8x128xf32> to vector<8x32xf32>
    %59 = arith.mulf %56, %39 : vector<8x32xf32>
    %60 = arith.mulf %55, %57 : vector<8x32xf32>
    %61 = arith.addf %59, %60 : vector<8x32xf32>
    %62 = math.tanh %61 : vector<8x32xf32>
    %63 = arith.mulf %58, %62 : vector<8x32xf32>
    %c2_i32 = arith.constant 2 : i32
    %c8_i32_23 = arith.constant 8 : i32
    %64 = arith.muli %c2_i32, %c8_i32_23 : i32
    %65 = tpu.assume_multiple %64, 8 : i32
    %66 = arith.index_cast %65 : i32 to index
    %c0_24 = arith.constant 0 : index
    %67 = vector.load %arg9[%66, %c0_24] : memref<64x128xf32, #tpu.memory_space<vmem>>, vector<8x128xf32>
    %cst_25 = arith.constant dense<0.000000e+00> : vector<8x128xf32>
    %68 = tpu.matmul %63, %11, %cst_25 {dimension_numbers = #tpu.dot_dimension_numbers<[1], [0], [0], [1], [0, 0, 1, 1], [], []>} : vector<8x32xf32>, vector<32x128xf32>, vector<8x128xf32> -> vector<8x128xf32>
    %69 = arith.addf %67, %68 : vector<8x128xf32>
    %70 = arith.negf %69 : vector<8x128xf32>
    %71 = math.exp %70 : vector<8x128xf32>
    %cst_26 = arith.constant 1.000000e+00 : f32
    %72 = vector.broadcast %cst_26 : f32 to vector<8x128xf32>
    %73 = arith.addf %72, %71 : vector<8x128xf32>
    %74 = arith.divf %72, %73 : vector<8x128xf32>
    %75 = math.tanh %69 : vector<8x128xf32>
    %76 = arith.select %17, %75, %74 : vector<8x128xi1>, vector<8x128xf32>
    %77 = vector.extract_strided_slice %76 {offsets = [0, 0], sizes = [8, 32], strides = [1, 1]} : vector<8x128xf32> to vector<8x32xf32>
    %78 = vector.extract_strided_slice %76 {offsets = [0, 32], sizes = [8, 32], strides = [1, 1]} : vector<8x128xf32> to vector<8x32xf32>
    %79 = vector.extract_strided_slice %76 {offsets = [0, 64], sizes = [8, 32], strides = [1, 1]} : vector<8x128xf32> to vector<8x32xf32>
    %80 = vector.extract_strided_slice %76 {offsets = [0, 96], sizes = [8, 32], strides = [1, 1]} : vector<8x128xf32> to vector<8x32xf32>
    %81 = arith.mulf %78, %61 : vector<8x32xf32>
    %82 = arith.mulf %77, %79 : vector<8x32xf32>
    %83 = arith.addf %81, %82 : vector<8x32xf32>
    %84 = math.tanh %83 : vector<8x32xf32>
    %85 = arith.mulf %80, %84 : vector<8x32xf32>
    %c3_i32 = arith.constant 3 : i32
    %c8_i32_27 = arith.constant 8 : i32
    %86 = arith.muli %c3_i32, %c8_i32_27 : i32
    %87 = tpu.assume_multiple %86, 8 : i32
    %88 = arith.index_cast %87 : i32 to index
    %c0_28 = arith.constant 0 : index
    %89 = vector.load %arg9[%88, %c0_28] : memref<64x128xf32, #tpu.memory_space<vmem>>, vector<8x128xf32>
    %cst_29 = arith.constant dense<0.000000e+00> : vector<8x128xf32>
    %90 = tpu.matmul %85, %11, %cst_29 {dimension_numbers = #tpu.dot_dimension_numbers<[1], [0], [0], [1], [0, 0, 1, 1], [], []>} : vector<8x32xf32>, vector<32x128xf32>, vector<8x128xf32> -> vector<8x128xf32>
    %91 = arith.addf %89, %90 : vector<8x128xf32>
    %92 = arith.negf %91 : vector<8x128xf32>
    %93 = math.exp %92 : vector<8x128xf32>
    %cst_30 = arith.constant 1.000000e+00 : f32
    %94 = vector.broadcast %cst_30 : f32 to vector<8x128xf32>
    %95 = arith.addf %94, %93 : vector<8x128xf32>
    %96 = arith.divf %94, %95 : vector<8x128xf32>
    %97 = math.tanh %91 : vector<8x128xf32>
    %98 = arith.select %17, %97, %96 : vector<8x128xi1>, vector<8x128xf32>
    %99 = vector.extract_strided_slice %98 {offsets = [0, 0], sizes = [8, 32], strides = [1, 1]} : vector<8x128xf32> to vector<8x32xf32>
    %100 = vector.extract_strided_slice %98 {offsets = [0, 32], sizes = [8, 32], strides = [1, 1]} : vector<8x128xf32> to vector<8x32xf32>
    %101 = vector.extract_strided_slice %98 {offsets = [0, 64], sizes = [8, 32], strides = [1, 1]} : vector<8x128xf32> to vector<8x32xf32>
    %102 = vector.extract_strided_slice %98 {offsets = [0, 96], sizes = [8, 32], strides = [1, 1]} : vector<8x128xf32> to vector<8x32xf32>
    %103 = arith.mulf %100, %83 : vector<8x32xf32>
    %104 = arith.mulf %99, %101 : vector<8x32xf32>
    %105 = arith.addf %103, %104 : vector<8x32xf32>
    %106 = math.tanh %105 : vector<8x32xf32>
    %107 = arith.mulf %102, %106 : vector<8x32xf32>
    %c4_i32 = arith.constant 4 : i32
    %c8_i32_31 = arith.constant 8 : i32
    %108 = arith.muli %c4_i32, %c8_i32_31 : i32
    %109 = tpu.assume_multiple %108, 8 : i32
    %110 = arith.index_cast %109 : i32 to index
    %c0_32 = arith.constant 0 : index
    %111 = vector.load %arg9[%110, %c0_32] : memref<64x128xf32, #tpu.memory_space<vmem>>, vector<8x128xf32>
    %cst_33 = arith.constant dense<0.000000e+00> : vector<8x128xf32>
    %112 = tpu.matmul %107, %11, %cst_33 {dimension_numbers = #tpu.dot_dimension_numbers<[1], [0], [0], [1], [0, 0, 1, 1], [], []>} : vector<8x32xf32>, vector<32x128xf32>, vector<8x128xf32> -> vector<8x128xf32>
    %113 = arith.addf %111, %112 : vector<8x128xf32>
    %114 = arith.negf %113 : vector<8x128xf32>
    %115 = math.exp %114 : vector<8x128xf32>
    %cst_34 = arith.constant 1.000000e+00 : f32
    %116 = vector.broadcast %cst_34 : f32 to vector<8x128xf32>
    %117 = arith.addf %116, %115 : vector<8x128xf32>
    %118 = arith.divf %116, %117 : vector<8x128xf32>
    %119 = math.tanh %113 : vector<8x128xf32>
    %120 = arith.select %17, %119, %118 : vector<8x128xi1>, vector<8x128xf32>
    %121 = vector.extract_strided_slice %120 {offsets = [0, 0], sizes = [8, 32], strides = [1, 1]} : vector<8x128xf32> to vector<8x32xf32>
    %122 = vector.extract_strided_slice %120 {offsets = [0, 32], sizes = [8, 32], strides = [1, 1]} : vector<8x128xf32> to vector<8x32xf32>
    %123 = vector.extract_strided_slice %120 {offsets = [0, 64], sizes = [8, 32], strides = [1, 1]} : vector<8x128xf32> to vector<8x32xf32>
    %124 = vector.extract_strided_slice %120 {offsets = [0, 96], sizes = [8, 32], strides = [1, 1]} : vector<8x128xf32> to vector<8x32xf32>
    %125 = arith.mulf %122, %105 : vector<8x32xf32>
    %126 = arith.mulf %121, %123 : vector<8x32xf32>
    %127 = arith.addf %125, %126 : vector<8x32xf32>
    %128 = math.tanh %127 : vector<8x32xf32>
    %129 = arith.mulf %124, %128 : vector<8x32xf32>
    %c5_i32 = arith.constant 5 : i32
    %c8_i32_35 = arith.constant 8 : i32
    %130 = arith.muli %c5_i32, %c8_i32_35 : i32
    %131 = tpu.assume_multiple %130, 8 : i32
    %132 = arith.index_cast %131 : i32 to index
    %c0_36 = arith.constant 0 : index
    %133 = vector.load %arg9[%132, %c0_36] : memref<64x128xf32, #tpu.memory_space<vmem>>, vector<8x128xf32>
    %cst_37 = arith.constant dense<0.000000e+00> : vector<8x128xf32>
    %134 = tpu.matmul %129, %11, %cst_37 {dimension_numbers = #tpu.dot_dimension_numbers<[1], [0], [0], [1], [0, 0, 1, 1], [], []>} : vector<8x32xf32>, vector<32x128xf32>, vector<8x128xf32> -> vector<8x128xf32>
    %135 = arith.addf %133, %134 : vector<8x128xf32>
    %136 = arith.negf %135 : vector<8x128xf32>
    %137 = math.exp %136 : vector<8x128xf32>
    %cst_38 = arith.constant 1.000000e+00 : f32
    %138 = vector.broadcast %cst_38 : f32 to vector<8x128xf32>
    %139 = arith.addf %138, %137 : vector<8x128xf32>
    %140 = arith.divf %138, %139 : vector<8x128xf32>
    %141 = math.tanh %135 : vector<8x128xf32>
    %142 = arith.select %17, %141, %140 : vector<8x128xi1>, vector<8x128xf32>
    %143 = vector.extract_strided_slice %142 {offsets = [0, 0], sizes = [8, 32], strides = [1, 1]} : vector<8x128xf32> to vector<8x32xf32>
    %144 = vector.extract_strided_slice %142 {offsets = [0, 32], sizes = [8, 32], strides = [1, 1]} : vector<8x128xf32> to vector<8x32xf32>
    %145 = vector.extract_strided_slice %142 {offsets = [0, 64], sizes = [8, 32], strides = [1, 1]} : vector<8x128xf32> to vector<8x32xf32>
    %146 = vector.extract_strided_slice %142 {offsets = [0, 96], sizes = [8, 32], strides = [1, 1]} : vector<8x128xf32> to vector<8x32xf32>
    %147 = arith.mulf %144, %127 : vector<8x32xf32>
    %148 = arith.mulf %143, %145 : vector<8x32xf32>
    %149 = arith.addf %147, %148 : vector<8x32xf32>
    %150 = math.tanh %149 : vector<8x32xf32>
    %151 = arith.mulf %146, %150 : vector<8x32xf32>
    %c6_i32 = arith.constant 6 : i32
    %c8_i32_39 = arith.constant 8 : i32
    %152 = arith.muli %c6_i32, %c8_i32_39 : i32
    %153 = tpu.assume_multiple %152, 8 : i32
    %154 = arith.index_cast %153 : i32 to index
    %c0_40 = arith.constant 0 : index
    %155 = vector.load %arg9[%154, %c0_40] : memref<64x128xf32, #tpu.memory_space<vmem>>, vector<8x128xf32>
    %cst_41 = arith.constant dense<0.000000e+00> : vector<8x128xf32>
    %156 = tpu.matmul %151, %11, %cst_41 {dimension_numbers = #tpu.dot_dimension_numbers<[1], [0], [0], [1], [0, 0, 1, 1], [], []>} : vector<8x32xf32>, vector<32x128xf32>, vector<8x128xf32> -> vector<8x128xf32>
    %157 = arith.addf %155, %156 : vector<8x128xf32>
    %158 = arith.negf %157 : vector<8x128xf32>
    %159 = math.exp %158 : vector<8x128xf32>
    %cst_42 = arith.constant 1.000000e+00 : f32
    %160 = vector.broadcast %cst_42 : f32 to vector<8x128xf32>
    %161 = arith.addf %160, %159 : vector<8x128xf32>
    %162 = arith.divf %160, %161 : vector<8x128xf32>
    %163 = math.tanh %157 : vector<8x128xf32>
    %164 = arith.select %17, %163, %162 : vector<8x128xi1>, vector<8x128xf32>
    %165 = vector.extract_strided_slice %164 {offsets = [0, 0], sizes = [8, 32], strides = [1, 1]} : vector<8x128xf32> to vector<8x32xf32>
    %166 = vector.extract_strided_slice %164 {offsets = [0, 32], sizes = [8, 32], strides = [1, 1]} : vector<8x128xf32> to vector<8x32xf32>
    %167 = vector.extract_strided_slice %164 {offsets = [0, 64], sizes = [8, 32], strides = [1, 1]} : vector<8x128xf32> to vector<8x32xf32>
    %168 = vector.extract_strided_slice %164 {offsets = [0, 96], sizes = [8, 32], strides = [1, 1]} : vector<8x128xf32> to vector<8x32xf32>
    %169 = arith.mulf %166, %149 : vector<8x32xf32>
    %170 = arith.mulf %165, %167 : vector<8x32xf32>
    %171 = arith.addf %169, %170 : vector<8x32xf32>
    %172 = math.tanh %171 : vector<8x32xf32>
    %173 = arith.mulf %168, %172 : vector<8x32xf32>
    %c7_i32 = arith.constant 7 : i32
    %c8_i32_43 = arith.constant 8 : i32
    %174 = arith.muli %c7_i32, %c8_i32_43 : i32
    %175 = tpu.assume_multiple %174, 8 : i32
    %176 = arith.index_cast %175 : i32 to index
    %c0_44 = arith.constant 0 : index
    %177 = vector.load %arg9[%176, %c0_44] : memref<64x128xf32, #tpu.memory_space<vmem>>, vector<8x128xf32>
    %cst_45 = arith.constant dense<0.000000e+00> : vector<8x128xf32>
    %178 = tpu.matmul %173, %11, %cst_45 {dimension_numbers = #tpu.dot_dimension_numbers<[1], [0], [0], [1], [0, 0, 1, 1], [], []>} : vector<8x32xf32>, vector<32x128xf32>, vector<8x128xf32> -> vector<8x128xf32>
    %179 = arith.addf %177, %178 : vector<8x128xf32>
    %180 = arith.negf %179 : vector<8x128xf32>
    %181 = math.exp %180 : vector<8x128xf32>
    %cst_46 = arith.constant 1.000000e+00 : f32
    %182 = vector.broadcast %cst_46 : f32 to vector<8x128xf32>
    %183 = arith.addf %182, %181 : vector<8x128xf32>
    %184 = arith.divf %182, %183 : vector<8x128xf32>
    %185 = math.tanh %179 : vector<8x128xf32>
    %186 = arith.select %17, %185, %184 : vector<8x128xi1>, vector<8x128xf32>
    %187 = vector.extract_strided_slice %186 {offsets = [0, 0], sizes = [8, 32], strides = [1, 1]} : vector<8x128xf32> to vector<8x32xf32>
    %188 = vector.extract_strided_slice %186 {offsets = [0, 32], sizes = [8, 32], strides = [1, 1]} : vector<8x128xf32> to vector<8x32xf32>
    %189 = vector.extract_strided_slice %186 {offsets = [0, 64], sizes = [8, 32], strides = [1, 1]} : vector<8x128xf32> to vector<8x32xf32>
    %190 = vector.extract_strided_slice %186 {offsets = [0, 96], sizes = [8, 32], strides = [1, 1]} : vector<8x128xf32> to vector<8x32xf32>
    %191 = arith.mulf %188, %171 : vector<8x32xf32>
    %192 = arith.mulf %187, %189 : vector<8x32xf32>
    %193 = arith.addf %191, %192 : vector<8x32xf32>
    %194 = math.tanh %193 : vector<8x32xf32>
    %195 = arith.mulf %190, %194 : vector<8x32xf32>
    %c8_i32_47 = arith.constant 8 : i32
    %c0_48 = arith.constant 0 : index
    %c0_49 = arith.constant 0 : index
    %196 = vector.load %arg10[%c0_48, %c0_49] : memref<8x32xf32, #tpu.memory_space<vmem>>, vector<8x32xf32>
    tpu.vector_store %arg10[%c0_48, %c0_49], %195 {strides = array<i32>} : memref<8x32xf32, #tpu.memory_space<vmem>>, vector<8x32xf32>,
    %c0_50 = arith.constant 0 : index
    %c0_51 = arith.constant 0 : index
    %197 = vector.load %arg11[%c0_50, %c0_51] : memref<8x32xf32, #tpu.memory_space<vmem>>, vector<8x32xf32>
    tpu.vector_store %arg11[%c0_50, %c0_51], %193 {strides = array<i32>} : memref<8x32xf32, #tpu.memory_space<vmem>>, vector<8x32xf32>,
    %c0_i32_52 = arith.constant 0 : i32
    %198 = arith.cmpi eq, %arg1, %c0_i32_52 : i32
    %199 = arith.extui %198 : i1 to i32
    %c0_i32_53 = arith.constant 0 : i32
    %200 = arith.cmpi ne, %199, %c0_i32_53 : i32
    scf.if %200 {
      %c0_54 = arith.constant 0 : index
      %c0_55 = arith.constant 0 : index
      %201 = vector.load %arg6[%c0_54, %c0_55] : memref<32x128xf32, #tpu.memory_space<vmem>>, vector<32x128xf32>
      %cst_56 = arith.constant dense<0.000000e+00> : vector<8x128xf32>
      %202 = tpu.matmul %195, %201, %cst_56 {dimension_numbers = #tpu.dot_dimension_numbers<[1], [0], [0], [1], [0, 0, 1, 1], [], []>} : vector<8x32xf32>, vector<32x128xf32>, vector<8x128xf32> -> vector<8x128xf32>
      %c0_57 = arith.constant 0 : index
      %c0_58 = arith.constant 0 : index
      %203 = vector.load %arg7[%c0_57, %c0_58] : memref<1x128xf32, #tpu.memory_space<vmem>>, vector<1x128xf32>
      %204 = vector.broadcast %203 : vector<1x128xf32> to vector<8x128xf32>
      %205 = arith.addf %202, %204 : vector<8x128xf32>
      %c0_59 = arith.constant 0 : index
      %c0_60 = arith.constant 0 : index
      %206 = vector.load %arg8[%c0_59, %c0_60] : memref<8x128xf32, #tpu.memory_space<vmem>>, vector<8x128xf32>
      tpu.vector_store %arg8[%c0_59, %c0_60], %205 {strides = array<i32>} : memref<8x128xf32, #tpu.memory_space<vmem>>, vector<8x128xf32>,
    } else {
    }
    return
  }
  func.func @transform_0(%arg0: i32, %arg1: i32) -> (i32, i32, i32) {
    %c0_i32 = arith.constant 0 : i32
    %c0_i32_0 = arith.constant 0 : i32
    return %arg1, %arg0, %c0_i32 : i32, i32, i32
  }
  func.func @transform_1(%arg0: i32, %arg1: i32) -> (i32, i32) {
    %c0_i32 = arith.constant 0 : i32
    %c0_i32_0 = arith.constant 0 : i32
    %c0_i32_1 = arith.constant 0 : i32
    return %c0_i32, %c0_i32_0 : i32, i32
  }
  func.func @transform_2(%arg0: i32, %arg1: i32) -> (i32, i32) {
    %c0_i32 = arith.constant 0 : i32
    %c0_i32_0 = arith.constant 0 : i32
    %c0_i32_1 = arith.constant 0 : i32
    return %c0_i32, %c0_i32_0 : i32, i32
  }
  func.func @transform_3(%arg0: i32, %arg1: i32) -> (i32, i32) {
    %c0_i32 = arith.constant 0 : i32
    %c0_i32_0 = arith.constant 0 : i32
    %c0_i32_1 = arith.constant 0 : i32
    return %c0_i32, %c0_i32_0 : i32, i32
  }
  func.func @transform_4(%arg0: i32, %arg1: i32) -> (i32, i32) {
    %c0_i32 = arith.constant 0 : i32
    %c0_i32_0 = arith.constant 0 : i32
    %c0_i32_1 = arith.constant 0 : i32
    return %c0_i32, %c0_i32_0 : i32, i32
  }
  func.func @transform_5(%arg0: i32, %arg1: i32) -> (i32, i32) {
    %c0_i32 = arith.constant 0 : i32
    %c0_i32_0 = arith.constant 0 : i32
    %c0_i32_1 = arith.constant 0 : i32
    return %c0_i32, %c0_i32_0 : i32, i32
  }
  func.func @transform_6(%arg0: i32, %arg1: i32) -> (i32, i32) {
    %c0_i32 = arith.constant 0 : i32
    %c0_i32_0 = arith.constant 0 : i32
    return %arg0, %c0_i32 : i32, i32
  }
}

</mosaic_0001>

<llo_original>
// kernel: tpu_custom_call.1
$region0: #{tpu_custom_call.1}
  #allocation0 [shape = 'u32[]', space=smem, size = 0x4, offset = 0x4, fixed_abs, tag = 'smem constant byte address 0x4 - core index']
  #allocation1 [shape = 'u32[144,128]{1,0:T(1,128)}', space=vmem, size = 0x12000, scoped, tag = 'internal scratch']
  #allocation2 [shape = 'f32[64,128]{1,0:T(8,128)}', space=vmem, size = 0x8000, scoped, tag = 'scratch operand']
  #allocation3 [shape = 'f32[8,32]{1,0:T(8,128)}', space=vmem, size = 0x1000, scoped, tag = 'scratch operand']
  #allocation4 [shape = 'f32[8,32]{1,0:T(8,128)}', space=vmem, size = 0x1000, scoped, tag = 'scratch operand']
  %s0 = inlined_call_operand.hbm [shape: f32[8,8,32], index: 0, kind: input, shape index: {}]
  %s1 = inlined_call_operand.hbm [shape: f32[32,128], index: 1, kind: input, shape index: {}]
  %s2 = inlined_call_operand.hbm [shape: f32[32,128], index: 2, kind: input, shape index: {}]
  %s3 = inlined_call_operand.vmem [shape: f32[1,128], index: 3, kind: input, shape index: {}]
  %s4 = inlined_call_operand.hbm [shape: f32[32,128], index: 4, kind: input, shape index: {}]
  %s5 = inlined_call_operand.vmem [shape: f32[1,128], index: 5, kind: input, shape index: {}]
  %s6 = inlined_call_operand.hbm [shape: f32[8,128], index: 6, kind: output, shape index: {}]
  %s7 = sld [smem:[#allocation0]]
  $region58: #{tpu_custom_call.1} parent=0
    _
  %s9 = ssub.s32 1, %s7
  %s10 = scalar_select 0, %s9, %s7
  $region1: #{tpu_custom_call.1} parent=0
    #allocation5 [shape = 'u8[32768]{0}', space=vmem, size = 0x8000, scoped, tag = 'input window, operand 0, single buffered']
    #allocation6 [shape = 's32[1]{0}', space=sflag, size = 0x4, scoped, tag = 'scoped memory for tpu_custom_call.1']
    #allocation7 [shape = 's32[1]{0}', space=sflag, size = 0x4, scoped, tag = 'scoped memory for tpu_custom_call.1']
    #allocation8 [shape = 'u8[16384]{0}', space=vmem, size = 0x4000, scoped, tag = 'input window, operand 1, single buffered']
    #allocation9 [shape = 's32[1]{0}', space=sflag, size = 0x4, scoped, tag = 'scoped memory for tpu_custom_call.1']
    #allocation10 [shape = 'u8[16384]{0}', space=vmem, size = 0x4000, scoped, tag = 'input window, operand 2, single buffered']
    #allocation11 [shape = 'u8[16384]{0}', space=vmem, size = 0x4000, scoped, tag = 'input window, operand 4, single buffered']
    #allocation12 [shape = 's32[1]{0}', space=sflag, size = 0x4, scoped, tag = 'scoped memory for tpu_custom_call.1']
    #allocation13 [shape = 'u8[4096]{0}', space=vmem, size = 0x1000, scoped, tag = 'output window, operand 0, single buffered']
    %11 = vsyncpa [#allocation6], 0
    %12 = vsyncpa [#allocation9], 0
    %13 = vsyncpa [#allocation12], 0
    %14 = vsyncpa [#allocation7], 0
    // Predicated region
    $region2: #{tpu_custom_call.1} parent=1 // pred_check
      _
    $region3: #{tpu_custom_call.1} parent=1 // pred_check_branch
      %16 = sbr.rel (0) target = $region5
    $region4: #{tpu_custom_call.1} parent=1 // pred_region
      %s18 = ssub.s32 1024, 1024
      %19 = vsyncadd [#allocation6], %s18
      %s20 = sshll.u32 [#allocation5], 4
      %s21 = int_to_ptr.vmem [resolvable:$true] %s20
      %26 = dma.hbm_to_vmem [thread:$0]  %s0, 1024, %s21, [#allocation6], 128, 128, 8
    $region5: #{tpu_custom_call.1} parent=1 // pred_fallthru
      _
    // Predicated region
    $region6: #{tpu_custom_call.1} parent=1 // pred_check
      _
    $region7: #{tpu_custom_call.1} parent=1 // pred_check_branch
      %28 = sbr.rel (0) target = $region9
    $region8: #{tpu_custom_call.1} parent=1 // pred_region
      %s30 = ssub.s32 512, 512
      %31 = vsyncadd [#allocation9], %s30
      %s32 = sshll.u32 [#allocation8], 4
      %s33 = int_to_ptr.vmem [resolvable:$true] %s32
      %38 = dma.hbm_to_vmem [thread:$0]  %s1, 512, %s33, [#allocation9], 128, 128, 8
    $region9: #{tpu_custom_call.1} parent=1 // pred_fallthru
      _
    // Predicated region
    $region10: #{tpu_custom_call.1} parent=1 // pred_check
      _
    $region11: #{tpu_custom_call.1} parent=1 // pred_check_branch
      %40 = sbr.rel (0) target = $region13
    $region12: #{tpu_custom_call.1} parent=1 // pred_region
      %s42 = ssub.s32 512, 512
      %43 = vsyncadd [#allocation9], %s42
      %s44 = sshll.u32 [#allocation10], 4
      %s45 = int_to_ptr.vmem [resolvable:$true] %s44
      %50 = dma.hbm_to_vmem [thread:$0]  %s2, 512, %s45, [#allocation9], 128, 128, 8
    $region13: #{tpu_custom_call.1} parent=1 // pred_fallthru
      _
    // Predicated region
    $region14: #{tpu_custom_call.1} parent=1 // pred_check
      _
    $region15: #{tpu_custom_call.1} parent=1 // pred_check_branch
      %52 = sbr.rel (0) target = $region17
    $region16: #{tpu_custom_call.1} parent=1 // pred_region
      _
    $region17: #{tpu_custom_call.1} parent=1 // pred_fallthru
      _
    // Predicated region
    $region18: #{tpu_custom_call.1} parent=1 // pred_check
      _
    $region19: #{tpu_custom_call.1} parent=1 // pred_check_branch
      %54 = sbr.rel (0) target = $region21
    $region20: #{tpu_custom_call.1} parent=1 // pred_region
      %s56 = ssub.s32 512, 512
      %57 = vsyncadd [#allocation12], %s56
      %s58 = sshll.u32 [#allocation11], 4
      %s59 = int_to_ptr.vmem [resolvable:$true] %s58
      %64 = dma.hbm_to_vmem [thread:$0]  %s4, 512, %s59, [#allocation12], 128, 128, 8
    $region21: #{tpu_custom_call.1} parent=1 // pred_fallthru
      _
    // Predicated region
    $region22: #{tpu_custom_call.1} parent=1 // pred_check
      _
    $region23: #{tpu_custom_call.1} parent=1 // pred_check_branch
      %66 = sbr.rel (0) target = $region25
    $region24: #{tpu_custom_call.1} parent=1 // pred_region
      _
    $region25: #{tpu_custom_call.1} parent=1 // pred_fallthru
      _
    // Predicated region
    $region26: #{tpu_custom_call.1} parent=1 // pred_check
      _
    $region27: #{tpu_custom_call.1} parent=1 // pred_check_branch
      %68 = sbr.rel (0) target = $region29
    $region28: #{tpu_custom_call.1} parent=1 // pred_region
      %69 = dma.done [#allocation6], 1024
    $region29: #{tpu_custom_call.1} parent=1 // pred_fallthru
      _
    // Predicated region
    $region30: #{tpu_custom_call.1} parent=1 // pred_check
      _
    $region31: #{tpu_custom_call.1} parent=1 // pred_check_branch
      %71 = sbr.rel (0) target = $region33
    $region32: #{tpu_custom_call.1} parent=1 // pred_region
      %72 = dma.done [#allocation9], 512
    $region33: #{tpu_custom_call.1} parent=1 // pred_fallthru
      _
    // Predicated region
    $region34: #{tpu_custom_call.1} parent=1 // pred_check
      _
    $region35: #{tpu_custom_call.1} parent=1 // pred_check_branch
      %74 = sbr.rel (0) target = $region37
    $region36: #{tpu_custom_call.1} parent=1 // pred_region
      %75 = dma.done [#allocation9], 512
    $region37: #{tpu_custom_call.1} parent=1 // pred_fallthru
      _
    // Predicated region
    $region38: #{tpu_custom_call.1} parent=1 // pred_check
      _
    $region39: #{tpu_custom_call.1} parent=1 // pred_check_branch
      %77 = sbr.rel (0) target = $region41
    $region40: #{tpu_custom_call.1} parent=1 // pred_region
      %78 = dma.done [#allocation12], 512
    $region41: #{tpu_custom_call.1} parent=1 // pred_fallthru
      _
    %v79 = vld [vmem:[#allocation5] sm:$0xff]
    %v80 = vld [vmem:[#allocation5 + $0x8] sm:$0xff]
    %v81 = vld [vmem:[#allocation5 + $0x10] sm:$0xff]
    %v82 = vld [vmem:[#allocation5 + $0x18] sm:$0xff]
    %v83 = vld [vmem:[#allocation5 + $0x20] sm:$0xff]
    %v84 = vld [vmem:[#allocation5 + $0x28] sm:$0xff]
    %v85 = vld [vmem:[#allocation5 + $0x30] sm:$0xff]
    %v86 = vld [vmem:[#allocation5 + $0x38] sm:$0xff]
    %v87 = vld [vmem:[#allocation8] sm:$0xff]
    %v88 = vld [vmem:[#allocation8 + $0x8] sm:$0xff]
    %v89 = vld [vmem:[#allocation8 + $0x10] sm:$0xff]
    %v90 = vld [vmem:[#allocation8 + $0x18] sm:$0xff]
    %v91 = vld [vmem:[%s3] sm:$0x1]
    %v93 = vlaneseq
    %v94 = vshrl.u32 %v93, 7
    %v95 = vsub.s32 0, %v94
    %v96 = vrot.slane %v91, %v95
    %vm98 = vcmask 261120
    %v100 = vsel %vm98, %v79, 0
    %v103 = vsel %vm98, %v80, 0
    %v106 = vsel %vm98, %v81, 0
    %v109 = vsel %vm98, %v82, 0
    %v112 = vsel %vm98, %v83, 0
    %v115 = vsel %vm98, %v84, 0
    %v118 = vsel %vm98, %v85, 0
    %v121 = vsel %vm98, %v86, 0
    %123 = vmatprep.subr.mxu0 0.0
    %124 = vmatpush1.msra.mxu0 %v87
    %125 = vmatprep.subr.mxu0 0.0
    %126 = vmatpush1.msra.mxu0 %v88
    %127 = vmatprep.subr.mxu0 0.0
    %128 = vmatpush1.msra.mxu0 %v89
    %129 = vmatprep.subr.mxu0 0.0
    %130 = vmatpush1.msra.mxu0 %v90
    %131 = vmatprep.subr.mxu0 0.0
    %132 = vmatpush1.msra.mxu0 0.0
    %133 = vmatprep.subr.mxu0 0.0
    %134 = vmatpush1.msra.mxu0 0.0
    %135 = vmatprep.subr.mxu0 0.0
    %136 = vmatpush1.msra.mxu0 0.0
    %137 = vmatprep.subr.mxu0 0.0
    %138 = vmatpush1.msra.mxu0 0.0
    %139 = vmatprep.subr.mxu0 0.0
    %140 = vmatpush1.msra.mxu0 0.0
    %141 = vmatprep.subr.mxu0 0.0
    %142 = vmatpush1.msra.mxu0 0.0
    %143 = vmatprep.subr.mxu0 0.0
    %144 = vmatpush1.msra.mxu0 0.0
    %145 = vmatprep.subr.mxu0 0.0
    %146 = vmatpush1.msra.mxu0 0.0
    %147 = vmatprep.subr.mxu0 0.0
    %148 = vmatpush1.msra.mxu0 0.0
    %149 = vmatprep.subr.mxu0 0.0
    %150 = vmatpush1.msra.mxu0 0.0
    %151 = vmatprep.subr.mxu0 0.0
    %152 = vmatpush1.msra.mxu0 0.0
    %153 = vmatprep.subr.mxu0 0.0
    %154 = vmatpush1.msra.mxu0 0.0
    %155 = vmatprep.subr.mxu0 0.0
    %156 = vmatpush1.msra.mxu0 0.0
    %157 = vmatprep.subr.mxu0 0.0
    %158 = vmatpush1.msra.mxu0 0.0
    %159 = vmatprep.subr.mxu0 0.0
    %160 = vmatpush1.msra.mxu0 0.0
    %161 = vmatprep.subr.mxu0 0.0
    %162 = vmatpush1.msra.mxu0 0.0
    %163 = vmatprep.subr.mxu0 0.0
    %164 = vmatpush1.msra.mxu0 0.0
    %165 = vmatprep.subr.mxu0 0.0
    %166 = vmatpush1.msra.mxu0 0.0
    %167 = vmatprep.subr.mxu0 0.0
    %168 = vmatpush1.msra.mxu0 0.0
    %169 = vmatprep.subr.mxu0 0.0
    %170 = vmatpush1.msra.mxu0 0.0
    %171 = vmatprep.subr.mxu0 0.0
    %172 = vmatpush1.msra.mxu0 0.0
    %173 = vmatprep.subr.mxu0 0.0
    %174 = vmatpush1.msra.mxu0 0.0
    %175 = vmatprep.subr.mxu0 0.0
    %176 = vmatpush1.msra.mxu0 0.0
    %177 = vmatprep.subr.mxu0 0.0
    %178 = vmatpush1.msra.mxu0 0.0
    %179 = vmatprep.subr.mxu0 0.0
    %180 = vmatpush1.msra.mxu0 0.0
    %181 = vmatprep.subr.mxu0 0.0
    %182 = vmatpush1.msra.mxu0 0.0
    %183 = vmatprep.subr.mxu0 0.0
    %184 = vmatpush1.msra.mxu0 0.0
    %185 = vmatprep.subr.mxu0 0.0
    %186 = vmatpush1.msra.mxu0 0.0
    %187 = vmatprep.mubr.f32.mxu0 0.0
    %188 = vmatmul.mubr.f32.gmra.mrb[0].mxu0 %v100
    %v189 = vpop.f32.mrb[0].mxu0
    %v190 = vadd.f32 %v96, %v189
    %v191 = vpop.f32.mrb[0].mxu0
    %192 = vmatprep.mubr.f32.mxu0 0.0
    %193 = vmatmul.mubr.f32.gmra.mrb[0].mxu0 %v103
    %v194 = vpop.f32.mrb[0].mxu0
    %v195 = vadd.f32 %v96, %v194
    %v196 = vpop.f32.mrb[0].mxu0
    %197 = vmatprep.mubr.f32.mxu0 0.0
    %198 = vmatmul.mubr.f32.gmra.mrb[0].mxu0 %v106
    %v199 = vpop.f32.mrb[0].mxu0
    %v200 = vadd.f32 %v96, %v199
    %v201 = vpop.f32.mrb[0].mxu0
    %202 = vmatprep.mubr.f32.mxu0 0.0
    %203 = vmatmul.mubr.f32.gmra.mrb[0].mxu0 %v109
    %v204 = vpop.f32.mrb[0].mxu0
    %v205 = vadd.f32 %v96, %v204
    %v206 = vpop.f32.mrb[0].mxu0
    %207 = vmatprep.mubr.f32.mxu0 0.0
    %208 = vmatmul.mubr.f32.gmra.mrb[0].mxu0 %v112
    %v209 = vpop.f32.mrb[0].mxu0
    %v210 = vadd.f32 %v96, %v209
    %v211 = vpop.f32.mrb[0].mxu0
    %212 = vmatprep.mubr.f32.mxu0 0.0
    %213 = vmatmul.mubr.f32.gmra.mrb[0].mxu0 %v115
    %v214 = vpop.f32.mrb[0].mxu0
    %v215 = vadd.f32 %v96, %v214
    %v216 = vpop.f32.mrb[0].mxu0
    %217 = vmatprep.mubr.f32.mxu0 0.0
    %218 = vmatmul.mubr.f32.gmra.mrb[0].mxu0 %v118
    %v219 = vpop.f32.mrb[0].mxu0
    %v220 = vadd.f32 %v96, %v219
    %v221 = vpop.f32.mrb[0].mxu0
    %222 = vmatprep.mubr.f32.mxu0 0.0
    %223 = vmatmul.mubr.f32.gmra.mrb[0].mxu0 %v121
    %v224 = vpop.f32.mrb[0].mxu0
    %v225 = vadd.f32 %v96, %v224
    %v226 = vpop.f32.mrb[0].mxu0
    %227 = vdwg.mxu0
    %228 = vst [vmem:[#allocation2] sm:$0xff] %v190
    %229 = vst [vmem:[#allocation2 + $0x8] sm:$0xff] %v195
    %230 = vst [vmem:[#allocation2 + $0x10] sm:$0xff] %v200
    %231 = vst [vmem:[#allocation2 + $0x18] sm:$0xff] %v205
    %232 = vst [vmem:[#allocation2 + $0x20] sm:$0xff] %v210
    %233 = vst [vmem:[#allocation2 + $0x28] sm:$0xff] %v215
    %234 = vst [vmem:[#allocation2 + $0x30] sm:$0xff] %v220
    %235 = vst [vmem:[#allocation2 + $0x38] sm:$0xff] %v225
    %p236 = scmp.eq.s32.totalorder 0, 0
    // Predicated region
    $region42: #{tpu_custom_call.1} parent=1 // pred_check
      %p237 = pneg %p236
    $region43: #{tpu_custom_call.1} parent=1 // pred_check_branch
      %239 = sbr.rel (%p237) target = $region45
    $region44: #{tpu_custom_call.1} parent=1 // pred_region
      %240 = vst.msk [vmem:[#allocation3] sm:$0xff] %vm98, 0.0
      %241 = vst.msk [vmem:[#allocation4] sm:$0xff] %vm98, 0.0
    $region45: #{tpu_custom_call.1} parent=1 // pred_fallthru
      _
    %v242 = vld [vmem:[#allocation10] sm:$0xff]
    %v243 = vld [vmem:[#allocation10 + $0x8] sm:$0xff]
    %v244 = vld [vmem:[#allocation10 + $0x10] sm:$0xff]
    %v245 = vld [vmem:[#allocation10 + $0x18] sm:$0xff]
    %v246 = vlaneseq
    %v247 = vand.u32 %v246, 127
    %vm248 = vcmp.ge.s32.totalorder %v247, 64
    %vm249 = vcmp.lt.s32.totalorder %v247, 96
    %vm250 = vmand %vm248, %vm249
    %v251 = vld [vmem:[#allocation3] sm:$0xff]
    %v252 = vld [vmem:[#allocation4] sm:$0xff]
    %v253 = vld [vmem:[#allocation2] sm:$0xff]
    %v255 = vsel %vm98, %v251, 0
    %257 = vmatprep.subr.mxu0 0.0
    %258 = vmatpush1.msra.mxu0 %v242
    %259 = vmatprep.subr.mxu0 0.0
    %260 = vmatpush1.msra.mxu0 %v243
    %261 = vmatprep.subr.mxu0 0.0
    %262 = vmatpush1.msra.mxu0 %v244
    %263 = vmatprep.subr.mxu0 0.0
    %264 = vmatpush1.msra.mxu0 %v245
    %265 = vmatprep.subr.mxu0 0.0
    %266 = vmatpush1.msra.mxu0 0.0
    %267 = vmatprep.subr.mxu0 0.0
    %268 = vmatpush1.msra.mxu0 0.0
    %269 = vmatprep.subr.mxu0 0.0
    %270 = vmatpush1.msra.mxu0 0.0
    %271 = vmatprep.subr.mxu0 0.0
    %272 = vmatpush1.msra.mxu0 0.0
    %273 = vmatprep.subr.mxu0 0.0
    %274 = vmatpush1.msra.mxu0 0.0
    %275 = vmatprep.subr.mxu0 0.0
    %276 = vmatpush1.msra.mxu0 0.0
    %277 = vmatprep.subr.mxu0 0.0
    %278 = vmatpush1.msra.mxu0 0.0
    %279 = vmatprep.subr.mxu0 0.0
    %280 = vmatpush1.msra.mxu0 0.0
    %281 = vmatprep.subr.mxu0 0.0
    %282 = vmatpush1.msra.mxu0 0.0
    %283 = vmatprep.subr.mxu0 0.0
    %284 = vmatpush1.msra.mxu0 0.0
    %285 = vmatprep.subr.mxu0 0.0
    %286 = vmatpush1.msra.mxu0 0.0
    %287 = vmatprep.subr.mxu0 0.0
    %288 = vmatpush1.msra.mxu0 0.0
    %289 = vmatprep.subr.mxu0 0.0
    %290 = vmatpush1.msra.mxu0 0.0
    %291 = vmatprep.subr.mxu0 0.0
    %292 = vmatpush1.msra.mxu0 0.0
    %293 = vmatprep.subr.mxu0 0.0
    %294 = vmatpush1.msra.mxu0 0.0
    %295 = vmatprep.subr.mxu0 0.0
    %296 = vmatpush1.msra.mxu0 0.0
    %297 = vmatprep.subr.mxu0 0.0
    %298 = vmatpush1.msra.mxu0 0.0
    %299 = vmatprep.subr.mxu0 0.0
    %300 = vmatpush1.msra.mxu0 0.0
    %301 = vmatprep.subr.mxu0 0.0
    %302 = vmatpush1.msra.mxu0 0.0
    %303 = vmatprep.subr.mxu0 0.0
    %304 = vmatpush1.msra.mxu0 0.0
    %305 = vmatprep.subr.mxu0 0.0
    %306 = vmatpush1.msra.mxu0 0.0
    %307 = vmatprep.subr.mxu0 0.0
    %308 = vmatpush1.msra.mxu0 0.0
    %309 = vmatprep.subr.mxu0 0.0
    %310 = vmatpush1.msra.mxu0 0.0
    %311 = vmatprep.subr.mxu0 0.0
    %312 = vmatpush1.msra.mxu0 0.0
    %313 = vmatprep.subr.mxu0 0.0
    %314 = vmatpush1.msra.mxu0 0.0
    %315 = vmatprep.subr.mxu0 0.0
    %316 = vmatpush1.msra.mxu0 0.0
    %317 = vmatprep.subr.mxu0 0.0
    %318 = vmatpush1.msra.mxu0 0.0
    %319 = vmatprep.subr.mxu0 0.0
    %320 = vmatpush1.msra.mxu0 0.0
    %321 = vmatprep.mubr.f32.mxu0 0.0
    %322 = vmatmul.mubr.f32.gmra.mrb[0].mxu0 %v255
    %v323 = vpop.f32.mrb[0].mxu0
    %v324 = vadd.f32 0.0, %v323
    %v325 = vpop.f32.mrb[0].mxu0
    %326 = vdwg.mxu0
    %v327 = vadd.f32 %v253, %v324
    %v328 = vxor.u32 %v327, 2147483648
    %v329 = vmul.f32 %v328, 1.442695
    %v330 = vpow.pop %v329
    %v331 = vadd.f32 %v330, 1.0
    %v332 = vrcp.pop %v331
    %v333 = vmul.f32 1.0, %v332
    %v334 = vtanh.pop %v327
    %v335 = vsel %vm250, %v334, %v333
    %337 = vrot.lane.b32.xlu0 %v252, 32
    %v338 = vpop.permute.xlu0 %337
    %v340 = vmul.f32 %v335, %v338
    %342 = vrot.lane.b32.xlu0 %v335, 64
    %v343 = vpop.permute.xlu0 %342
    %v345 = vmul.f32 %v335, %v343
    %347 = vrot.lane.b32.xlu0 %v345, 32
    %v348 = vpop.permute.xlu0 %347
    %v350 = vadd.f32 %v340, %v348
    %v351 = vtanh.pop %v350
    %353 = vrot.lane.b32.xlu0 %v351, 64
    %v354 = vpop.permute.xlu0 %353
    %v356 = vmul.f32 %v335, %v354
    %s357 = scalar_lea.vmem [#allocation2], 8
    %v358 = vld [vmem:[%s357] sm:$0xff]
    %360 = vrot.lane.b32.xlu0 %v356, 32
    %v361 = vpop.permute.xlu0 %360
    %v362 = vsel %vm98, %v361, 0
    %364 = vmatprep.subr.mxu0 0.0
    %365 = vmatpush1.msra.mxu0 %v242
    %366 = vmatprep.subr.mxu0 0.0
    %367 = vmatpush1.msra.mxu0 %v243
    %368 = vmatprep.subr.mxu0 0.0
    %369 = vmatpush1.msra.mxu0 %v244
    %370 = vmatprep.subr.mxu0 0.0
    %371 = vmatpush1.msra.mxu0 %v245
    %372 = vmatprep.subr.mxu0 0.0
    %373 = vmatpush1.msra.mxu0 0.0
    %374 = vmatprep.subr.mxu0 0.0
    %375 = vmatpush1.msra.mxu0 0.0
    %376 = vmatprep.subr.mxu0 0.0
    %377 = vmatpush1.msra.mxu0 0.0
    %378 = vmatprep.subr.mxu0 0.0
    %379 = vmatpush1.msra.mxu0 0.0
    %380 = vmatprep.subr.mxu0 0.0
    %381 = vmatpush1.msra.mxu0 0.0
    %382 = vmatprep.subr.mxu0 0.0
    %383 = vmatpush1.msra.mxu0 0.0
    %384 = vmatprep.subr.mxu0 0.0
    %385 = vmatpush1.msra.mxu0 0.0
    %386 = vmatprep.subr.mxu0 0.0
    %387 = vmatpush1.msra.mxu0 0.0
    %388 = vmatprep.subr.mxu0 0.0
    %389 = vmatpush1.msra.mxu0 0.0
    %390 = vmatprep.subr.mxu0 0.0
    %391 = vmatpush1.msra.mxu0 0.0
    %392 = vmatprep.subr.mxu0 0.0
    %393 = vmatpush1.msra.mxu0 0.0
    %394 = vmatprep.subr.mxu0 0.0
    %395 = vmatpush1.msra.mxu0 0.0
    %396 = vmatprep.subr.mxu0 0.0
    %397 = vmatpush1.msra.mxu0 0.0
    %398 = vmatprep.subr.mxu0 0.0
    %399 = vmatpush1.msra.mxu0 0.0
    %400 = vmatprep.subr.mxu0 0.0
    %401 = vmatpush1.msra.mxu0 0.0
    %402 = vmatprep.subr.mxu0 0.0
    %403 = vmatpush1.msra.mxu0 0.0
    %404 = vmatprep.subr.mxu0 0.0
    %405 = vmatpush1.msra.mxu0 0.0
    %406 = vmatprep.subr.mxu0 0.0
    %407 = vmatpush1.msra.mxu0 0.0
    %408 = vmatprep.subr.mxu0 0.0
    %409 = vmatpush1.msra.mxu0 0.0
    %410 = vmatprep.subr.mxu0 0.0
    %411 = vmatpush1.msra.mxu0 0.0
    %412 = vmatprep.subr.mxu0 0.0
    %413 = vmatpush1.msra.mxu0 0.0
    %414 = vmatprep.subr.mxu0 0.0
    %415 = vmatpush1.msra.mxu0 0.0
    %416 = vmatprep.subr.mxu0 0.0
    %417 = vmatpush1.msra.mxu0 0.0
    %418 = vmatprep.subr.mxu0 0.0
    %419 = vmatpush1.msra.mxu0 0.0
    %420 = vmatprep.subr.mxu0 0.0
    %421 = vmatpush1.msra.mxu0 0.0
    %422 = vmatprep.subr.mxu0 0.0
    %423 = vmatpush1.msra.mxu0 0.0
    %424 = vmatprep.subr.mxu0 0.0
    %425 = vmatpush1.msra.mxu0 0.0
    %426 = vmatprep.subr.mxu0 0.0
    %427 = vmatpush1.msra.mxu0 0.0
    %428 = vmatprep.mubr.f32.mxu0 0.0
    %429 = vmatmul.mubr.f32.gmra.mrb[0].mxu0 %v362
    %v430 = vpop.f32.mrb[0].mxu0
    %v431 = vadd.f32 0.0, %v430
    %v432 = vpop.f32.mrb[0].mxu0
    %433 = vdwg.mxu0
    %v434 = vadd.f32 %v358, %v431
    %v435 = vxor.u32 %v434, 2147483648
    %v436 = vmul.f32 %v435, 1.442695
    %v437 = vpow.pop %v436
    %v438 = vadd.f32 %v437, 1.0
    %v439 = vrcp.pop %v438
    %v440 = vmul.f32 1.0, %v439
    %v441 = vtanh.pop %v434
    %v442 = vsel %vm250, %v441, %v440
    %v443 = vmul.f32 %v442, %v350
    %445 = vrot.lane.b32.xlu0 %v442, 64
    %v446 = vpop.permute.xlu0 %445
    %v448 = vmul.f32 %v442, %v446
    %450 = vrot.lane.b32.xlu0 %v448, 32
    %v451 = vpop.permute.xlu0 %450
    %v453 = vadd.f32 %v443, %v451
    %v454 = vtanh.pop %v453
    %456 = vrot.lane.b32.xlu0 %v454, 64
    %v457 = vpop.permute.xlu0 %456
    %v459 = vmul.f32 %v442, %v457
    %s460 = scalar_lea.vmem [#allocation2], 16
    %v461 = vld [vmem:[%s460] sm:$0xff]
    %463 = vrot.lane.b32.xlu0 %v459, 32
    %v464 = vpop.permute.xlu0 %463
    %v465 = vsel %vm98, %v464, 0
    %467 = vmatprep.subr.mxu0 0.0
    %468 = vmatpush1.msra.mxu0 %v242
    %469 = vmatprep.subr.mxu0 0.0
    %470 = vmatpush1.msra.mxu0 %v243
    %471 = vmatprep.subr.mxu0 0.0
    %472 = vmatpush1.msra.mxu0 %v244
    %473 = vmatprep.subr.mxu0 0.0
    %474 = vmatpush1.msra.mxu0 %v245
    %475 = vmatprep.subr.mxu0 0.0
    %476 = vmatpush1.msra.mxu0 0.0
    %477 = vmatprep.subr.mxu0 0.0
    %478 = vmatpush1.msra.mxu0 0.0
    %479 = vmatprep.subr.mxu0 0.0
    %480 = vmatpush1.msra.mxu0 0.0
    %481 = vmatprep.subr.mxu0 0.0
    %482 = vmatpush1.msra.mxu0 0.0
    %483 = vmatprep.subr.mxu0 0.0
    %484 = vmatpush1.msra.mxu0 0.0
    %485 = vmatprep.subr.mxu0 0.0
    %486 = vmatpush1.msra.mxu0 0.0
    %487 = vmatprep.subr.mxu0 0.0
    %488 = vmatpush1.msra.mxu0 0.0
    %489 = vmatprep.subr.mxu0 0.0
    %490 = vmatpush1.msra.mxu0 0.0
    %491 = vmatprep.subr.mxu0 0.0
    %492 = vmatpush1.msra.mxu0 0.0
    %493 = vmatprep.subr.mxu0 0.0
    %494 = vmatpush1.msra.mxu0 0.0
    %495 = vmatprep.subr.mxu0 0.0
    %496 = vmatpush1.msra.mxu0 0.0
    %497 = vmatprep.subr.mxu0 0.0
    %498 = vmatpush1.msra.mxu0 0.0
    %499 = vmatprep.subr.mxu0 0.0
    %500 = vmatpush1.msra.mxu0 0.0
    %501 = vmatprep.subr.mxu0 0.0
    %502 = vmatpush1.msra.mxu0 0.0
    %503 = vmatprep.subr.mxu0 0.0
    %504 = vmatpush1.msra.mxu0 0.0
    %505 = vmatprep.subr.mxu0 0.0
    %506 = vmatpush1.msra.mxu0 0.0
    %507 = vmatprep.subr.mxu0 0.0
    %508 = vmatpush1.msra.mxu0 0.0
    %509 = vmatprep.subr.mxu0 0.0
    %510 = vmatpush1.msra.mxu0 0.0
    %511 = vmatprep.subr.mxu0 0.0
    %512 = vmatpush1.msra.mxu0 0.0
    %513 = vmatprep.subr.mxu0 0.0
    %514 = vmatpush1.msra.mxu0 0.0
    %515 = vmatprep.subr.mxu0 0.0
    %516 = vmatpush1.msra.mxu0 0.0
    %517 = vmatprep.subr.mxu0 0.0
    %518 = vmatpush1.msra.mxu0 0.0
    %519 = vmatprep.subr.mxu0 0.0
    %520 = vmatpush1.msra.mxu0 0.0
    %521 = vmatprep.subr.mxu0 0.0
    %522 = vmatpush1.msra.mxu0 0.0
    %523 = vmatprep.subr.mxu0 0.0
    %524 = vmatpush1.msra.mxu0 0.0
    %525 = vmatprep.subr.mxu0 0.0
    %526 = vmatpush1.msra.mxu0 0.0
    %527 = vmatprep.subr.mxu0 0.0
    %528 = vmatpush1.msra.mxu0 0.0
    %529 = vmatprep.subr.mxu0 0.0
    %530 = vmatpush1.msra.mxu0 0.0
    %531 = vmatprep.mubr.f32.mxu0 0.0
    %532 = vmatmul.mubr.f32.gmra.mrb[0].mxu0 %v465
    %v533 = vpop.f32.mrb[0].mxu0
    %v534 = vadd.f32 0.0, %v533
    %v535 = vpop.f32.mrb[0].mxu0
    %536 = vdwg.mxu0
    %v537 = vadd.f32 %v461, %v534
    %v538 = vxor.u32 %v537, 2147483648
    %v539 = vmul.f32 %v538, 1.442695
    %v540 = vpow.pop %v539
    %v541 = vadd.f32 %v540, 1.0
    %v542 = vrcp.pop %v541
    %v543 = vmul.f32 1.0, %v542
    %v544 = vtanh.pop %v537
    %v545 = vsel %vm250, %v544, %v543
    %v546 = vmul.f32 %v545, %v453
    %548 = vrot.lane.b32.xlu0 %v545, 64
    %v549 = vpop.permute.xlu0 %548
    %v551 = vmul.f32 %v545, %v549
    %553 = vrot.lane.b32.xlu0 %v551, 32
    %v554 = vpop.permute.xlu0 %553
    %v556 = vadd.f32 %v546, %v554
    %v557 = vtanh.pop %v556
    %559 = vrot.lane.b32.xlu0 %v557, 64
    %v560 = vpop.permute.xlu0 %559
    %v562 = vmul.f32 %v545, %v560
    %s563 = scalar_lea.vmem [#allocation2], 24
    %v564 = vld [vmem:[%s563] sm:$0xff]
    %566 = vrot.lane.b32.xlu0 %v562, 32
    %v567 = vpop.permute.xlu0 %566
    %v568 = vsel %vm98, %v567, 0
    %570 = vmatprep.subr.mxu0 0.0
    %571 = vmatpush1.msra.mxu0 %v242
    %572 = vmatprep.subr.mxu0 0.0
    %573 = vmatpush1.msra.mxu0 %v243
    %574 = vmatprep.subr.mxu0 0.0
    %575 = vmatpush1.msra.mxu0 %v244
    %576 = vmatprep.subr.mxu0 0.0
    %577 = vmatpush1.msra.mxu0 %v245
    %578 = vmatprep.subr.mxu0 0.0
    %579 = vmatpush1.msra.mxu0 0.0
    %580 = vmatprep.subr.mxu0 0.0
    %581 = vmatpush1.msra.mxu0 0.0
    %582 = vmatprep.subr.mxu0 0.0
    %583 = vmatpush1.msra.mxu0 0.0
    %584 = vmatprep.subr.mxu0 0.0
    %585 = vmatpush1.msra.mxu0 0.0
    %586 = vmatprep.subr.mxu0 0.0
    %587 = vmatpush1.msra.mxu0 0.0
    %588 = vmatprep.subr.mxu0 0.0
    %589 = vmatpush1.msra.mxu0 0.0
    %590 = vmatprep.subr.mxu0 0.0
    %591 = vmatpush1.msra.mxu0 0.0
    %592 = vmatprep.subr.mxu0 0.0
    %593 = vmatpush1.msra.mxu0 0.0
    %594 = vmatprep.subr.mxu0 0.0
    %595 = vmatpush1.msra.mxu0 0.0
    %596 = vmatprep.subr.mxu0 0.0
    %597 = vmatpush1.msra.mxu0 0.0
    %598 = vmatprep.subr.mxu0 0.0
    %599 = vmatpush1.msra.mxu0 0.0
    %600 = vmatprep.subr.mxu0 0.0
    %601 = vmatpush1.msra.mxu0 0.0
    %602 = vmatprep.subr.mxu0 0.0
    %603 = vmatpush1.msra.mxu0 0.0
    %604 = vmatprep.subr.mxu0 0.0
    %605 = vmatpush1.msra.mxu0 0.0
    %606 = vmatprep.subr.mxu0 0.0
    %607 = vmatpush1.msra.mxu0 0.0
    %608 = vmatprep.subr.mxu0 0.0
    %609 = vmatpush1.msra.mxu0 0.0
    %610 = vmatprep.subr.mxu0 0.0
    %611 = vmatpush1.msra.mxu0 0.0
    %612 = vmatprep.subr.mxu0 0.0
    %613 = vmatpush1.msra.mxu0 0.0
    %614 = vmatprep.subr.mxu0 0.0
    %615 = vmatpush1.msra.mxu0 0.0
    %616 = vmatprep.subr.mxu0 0.0
    %617 = vmatpush1.msra.mxu0 0.0
    %618 = vmatprep.subr.mxu0 0.0
    %619 = vmatpush1.msra.mxu0 0.0
    %620 = vmatprep.subr.mxu0 0.0
    %621 = vmatpush1.msra.mxu0 0.0
    %622 = vmatprep.subr.mxu0 0.0
    %623 = vmatpush1.msra.mxu0 0.0
    %624 = vmatprep.subr.mxu0 0.0
    %625 = vmatpush1.msra.mxu0 0.0
    %626 = vmatprep.subr.mxu0 0.0
    %627 = vmatpush1.msra.mxu0 0.0
    %628 = vmatprep.subr.mxu0 0.0
    %629 = vmatpush1.msra.mxu0 0.0
    %630 = vmatprep.subr.mxu0 0.0
    %631 = vmatpush1.msra.mxu0 0.0
    %632 = vmatprep.subr.mxu0 0.0
    %633 = vmatpush1.msra.mxu0 0.0
    %634 = vmatprep.mubr.f32.mxu0 0.0
    %635 = vmatmul.mubr.f32.gmra.mrb[0].mxu0 %v568
    %v636 = vpop.f32.mrb[0].mxu0
    %v637 = vadd.f32 0.0, %v636
    %v638 = vpop.f32.mrb[0].mxu0
    %639 = vdwg.mxu0
    %v640 = vadd.f32 %v564, %v637
    %v641 = vxor.u32 %v640, 2147483648
    %v642 = vmul.f32 %v641, 1.442695
    %v643 = vpow.pop %v642
    %v644 = vadd.f32 %v643, 1.0
    %v645 = vrcp.pop %v644
    %v646 = vmul.f32 1.0, %v645
    %v647 = vtanh.pop %v640
    %v648 = vsel %vm250, %v647, %v646
    %v649 = vmul.f32 %v648, %v556
    %651 = vrot.lane.b32.xlu0 %v648, 64
    %v652 = vpop.permute.xlu0 %651
    %v654 = vmul.f32 %v648, %v652
    %656 = vrot.lane.b32.xlu0 %v654, 32
    %v657 = vpop.permute.xlu0 %656
    %v659 = vadd.f32 %v649, %v657
    %v660 = vtanh.pop %v659
    %662 = vrot.lane.b32.xlu0 %v660, 64
    %v663 = vpop.permute.xlu0 %662
    %v665 = vmul.f32 %v648, %v663
    %s666 = scalar_lea.vmem [#allocation2], 32
    %v667 = vld [vmem:[%s666] sm:$0xff]
    %669 = vrot.lane.b32.xlu0 %v665, 32
    %v670 = vpop.permute.xlu0 %669
    %v671 = vsel %vm98, %v670, 0
    %673 = vmatprep.subr.mxu0 0.0
    %674 = vmatpush1.msra.mxu0 %v242
    %675 = vmatprep.subr.mxu0 0.0
    %676 = vmatpush1.msra.mxu0 %v243
    %677 = vmatprep.subr.mxu0 0.0
    %678 = vmatpush1.msra.mxu0 %v244
    %679 = vmatprep.subr.mxu0 0.0
    %680 = vmatpush1.msra.mxu0 %v245
    %681 = vmatprep.subr.mxu0 0.0
    %682 = vmatpush1.msra.mxu0 0.0
    %683 = vmatprep.subr.mxu0 0.0
    %684 = vmatpush1.msra.mxu0 0.0
    %685 = vmatprep.subr.mxu0 0.0
    %686 = vmatpush1.msra.mxu0 0.0
    %687 = vmatprep.subr.mxu0 0.0
    %688 = vmatpush1.msra.mxu0 0.0
    %689 = vmatprep.subr.mxu0 0.0
    %690 = vmatpush1.msra.mxu0 0.0
    %691 = vmatprep.subr.mxu0 0.0
    %692 = vmatpush1.msra.mxu0 0.0
    %693 = vmatprep.subr.mxu0 0.0
    %694 = vmatpush1.msra.mxu0 0.0
    %695 = vmatprep.subr.mxu0 0.0
    %696 = vmatpush1.msra.mxu0 0.0
    %697 = vmatprep.subr.mxu0 0.0
    %698 = vmatpush1.msra.mxu0 0.0
    %699 = vmatprep.subr.mxu0 0.0
    %700 = vmatpush1.msra.mxu0 0.0
    %701 = vmatprep.subr.mxu0 0.0
    %702 = vmatpush1.msra.mxu0 0.0
    %703 = vmatprep.subr.mxu0 0.0
    %704 = vmatpush1.msra.mxu0 0.0
    %705 = vmatprep.subr.mxu0 0.0
    %706 = vmatpush1.msra.mxu0 0.0
    %707 = vmatprep.subr.mxu0 0.0
    %708 = vmatpush1.msra.mxu0 0.0
    %709 = vmatprep.subr.mxu0 0.0
    %710 = vmatpush1.msra.mxu0 0.0
    %711 = vmatprep.subr.mxu0 0.0
    %712 = vmatpush1.msra.mxu0 0.0
    %713 = vmatprep.subr.mxu0 0.0
    %714 = vmatpush1.msra.mxu0 0.0
    %715 = vmatprep.subr.mxu0 0.0
    %716 = vmatpush1.msra.mxu0 0.0
    %717 = vmatprep.subr.mxu0 0.0
    %718 = vmatpush1.msra.mxu0 0.0
    %719 = vmatprep.subr.mxu0 0.0
    %720 = vmatpush1.msra.mxu0 0.0
    %721 = vmatprep.subr.mxu0 0.0
    %722 = vmatpush1.msra.mxu0 0.0
    %723 = vmatprep.subr.mxu0 0.0
    %724 = vmatpush1.msra.mxu0 0.0
    %725 = vmatprep.subr.mxu0 0.0
    %726 = vmatpush1.msra.mxu0 0.0
    %727 = vmatprep.subr.mxu0 0.0
    %728 = vmatpush1.msra.mxu0 0.0
    %729 = vmatprep.subr.mxu0 0.0
    %730 = vmatpush1.msra.mxu0 0.0
    %731 = vmatprep.subr.mxu0 0.0
    %732 = vmatpush1.msra.mxu0 0.0
    %733 = vmatprep.subr.mxu0 0.0
    %734 = vmatpush1.msra.mxu0 0.0
    %735 = vmatprep.subr.mxu0 0.0
    %736 = vmatpush1.msra.mxu0 0.0
    %737 = vmatprep.mubr.f32.mxu0 0.0
    %738 = vmatmul.mubr.f32.gmra.mrb[0].mxu0 %v671
    %v739 = vpop.f32.mrb[0].mxu0
    %v740 = vadd.f32 0.0, %v739
    %v741 = vpop.f32.mrb[0].mxu0
    %742 = vdwg.mxu0
    %v743 = vadd.f32 %v667, %v740
    %v744 = vxor.u32 %v743, 2147483648
    %v745 = vmul.f32 %v744, 1.442695
    %v746 = vpow.pop %v745
    %v747 = vadd.f32 %v746, 1.0
    %v748 = vrcp.pop %v747
    %v749 = vmul.f32 1.0, %v748
    %v750 = vtanh.pop %v743
    %v751 = vsel %vm250, %v750, %v749
    %v752 = vmul.f32 %v751, %v659
    %754 = vrot.lane.b32.xlu0 %v751, 64
    %v755 = vpop.permute.xlu0 %754
    %v757 = vmul.f32 %v751, %v755
    %759 = vrot.lane.b32.xlu0 %v757, 32
    %v760 = vpop.permute.xlu0 %759
    %v762 = vadd.f32 %v752, %v760
    %v763 = vtanh.pop %v762
    %765 = vrot.lane.b32.xlu0 %v763, 64
    %v766 = vpop.permute.xlu0 %765
    %v768 = vmul.f32 %v751, %v766
    %s769 = scalar_lea.vmem [#allocation2], 40
    %v770 = vld [vmem:[%s769] sm:$0xff]
    %772 = vrot.lane.b32.xlu0 %v768, 32
    %v773 = vpop.permute.xlu0 %772
    %v774 = vsel %vm98, %v773, 0
    %776 = vmatprep.subr.mxu0 0.0
    %777 = vmatpush1.msra.mxu0 %v242
    %778 = vmatprep.subr.mxu0 0.0
    %779 = vmatpush1.msra.mxu0 %v243
    %780 = vmatprep.subr.mxu0 0.0
    %781 = vmatpush1.msra.mxu0 %v244
    %782 = vmatprep.subr.mxu0 0.0
    %783 = vmatpush1.msra.mxu0 %v245
    %784 = vmatprep.subr.mxu0 0.0
    %785 = vmatpush1.msra.mxu0 0.0
    %786 = vmatprep.subr.mxu0 0.0
    %787 = vmatpush1.msra.mxu0 0.0
    %788 = vmatprep.subr.mxu0 0.0
    %789 = vmatpush1.msra.mxu0 0.0
    %790 = vmatprep.subr.mxu0 0.0
    %791 = vmatpush1.msra.mxu0 0.0
    %792 = vmatprep.subr.mxu0 0.0
    %793 = vmatpush1.msra.mxu0 0.0
    %794 = vmatprep.subr.mxu0 0.0
    %795 = vmatpush1.msra.mxu0 0.0
    %796 = vmatprep.subr.mxu0 0.0
    %797 = vmatpush1.msra.mxu0 0.0
    %798 = vmatprep.subr.mxu0 0.0
    %799 = vmatpush1.msra.mxu0 0.0
    %800 = vmatprep.subr.mxu0 0.0
    %801 = vmatpush1.msra.mxu0 0.0
    %802 = vmatprep.subr.mxu0 0.0
    %803 = vmatpush1.msra.mxu0 0.0
    %804 = vmatprep.subr.mxu0 0.0
    %805 = vmatpush1.msra.mxu0 0.0
    %806 = vmatprep.subr.mxu0 0.0
    %807 = vmatpush1.msra.mxu0 0.0
    %808 = vmatprep.subr.mxu0 0.0
    %809 = vmatpush1.msra.mxu0 0.0
    %810 = vmatprep.subr.mxu0 0.0
    %811 = vmatpush1.msra.mxu0 0.0
    %812 = vmatprep.subr.mxu0 0.0
    %813 = vmatpush1.msra.mxu0 0.0
    %814 = vmatprep.subr.mxu0 0.0
    %815 = vmatpush1.msra.mxu0 0.0
    %816 = vmatprep.subr.mxu0 0.0
    %817 = vmatpush1.msra.mxu0 0.0
    %818 = vmatprep.subr.mxu0 0.0
    %819 = vmatpush1.msra.mxu0 0.0
    %820 = vmatprep.subr.mxu0 0.0
    %821 = vmatpush1.msra.mxu0 0.0
    %822 = vmatprep.subr.mxu0 0.0
    %823 = vmatpush1.msra.mxu0 0.0
    %824 = vmatprep.subr.mxu0 0.0
    %825 = vmatpush1.msra.mxu0 0.0
    %826 = vmatprep.subr.mxu0 0.0
    %827 = vmatpush1.msra.mxu0 0.0
    %828 = vmatprep.subr.mxu0 0.0
    %829 = vmatpush1.msra.mxu0 0.0
    %830 = vmatprep.subr.mxu0 0.0
    %831 = vmatpush1.msra.mxu0 0.0
    %832 = vmatprep.subr.mxu0 0.0
    %833 = vmatpush1.msra.mxu0 0.0
    %834 = vmatprep.subr.mxu0 0.0
    %835 = vmatpush1.msra.mxu0 0.0
    %836 = vmatprep.subr.mxu0 0.0
    %837 = vmatpush1.msra.mxu0 0.0
    %838 = vmatprep.subr.mxu0 0.0
    %839 = vmatpush1.msra.mxu0 0.0
    %840 = vmatprep.mubr.f32.mxu0 0.0
    %841 = vmatmul.mubr.f32.gmra.mrb[0].mxu0 %v774
    %v842 = vpop.f32.mrb[0].mxu0
    %v843 = vadd.f32 0.0, %v842
    %v844 = vpop.f32.mrb[0].mxu0
    %845 = vdwg.mxu0
    %v846 = vadd.f32 %v770, %v843
    %v847 = vxor.u32 %v846, 2147483648
    %v848 = vmul.f32 %v847, 1.442695
    %v849 = vpow.pop %v848
    %v850 = vadd.f32 %v849, 1.0
    %v851 = vrcp.pop %v850
    %v852 = vmul.f32 1.0, %v851
    %v853 = vtanh.pop %v846
    %v854 = vsel %vm250, %v853, %v852
    %v855 = vmul.f32 %v854, %v762
    %857 = vrot.lane.b32.xlu0 %v854, 64
    %v858 = vpop.permute.xlu0 %857
    %v860 = vmul.f32 %v854, %v858
    %862 = vrot.lane.b32.xlu0 %v860, 32
    %v863 = vpop.permute.xlu0 %862
    %v865 = vadd.f32 %v855, %v863
    %v866 = vtanh.pop %v865
    %868 = vrot.lane.b32.xlu0 %v866, 64
    %v869 = vpop.permute.xlu0 %868
    %v871 = vmul.f32 %v854, %v869
    %s872 = scalar_lea.vmem [#allocation2], 48
    %v873 = vld [vmem:[%s872] sm:$0xff]
    %875 = vrot.lane.b32.xlu0 %v871, 32
    %v876 = vpop.permute.xlu0 %875
    %v877 = vsel %vm98, %v876, 0
    %879 = vmatprep.subr.mxu0 0.0
    %880 = vmatpush1.msra.mxu0 %v242
    %881 = vmatprep.subr.mxu0 0.0
    %882 = vmatpush1.msra.mxu0 %v243
    %883 = vmatprep.subr.mxu0 0.0
    %884 = vmatpush1.msra.mxu0 %v244
    %885 = vmatprep.subr.mxu0 0.0
    %886 = vmatpush1.msra.mxu0 %v245
    %887 = vmatprep.subr.mxu0 0.0
    %888 = vmatpush1.msra.mxu0 0.0
    %889 = vmatprep.subr.mxu0 0.0
    %890 = vmatpush1.msra.mxu0 0.0
    %891 = vmatprep.subr.mxu0 0.0
    %892 = vmatpush1.msra.mxu0 0.0
    %893 = vmatprep.subr.mxu0 0.0
    %894 = vmatpush1.msra.mxu0 0.0
    %895 = vmatprep.subr.mxu0 0.0
    %896 = vmatpush1.msra.mxu0 0.0
    %897 = vmatprep.subr.mxu0 0.0
    %898 = vmatpush1.msra.mxu0 0.0
    %899 = vmatprep.subr.mxu0 0.0
    %900 = vmatpush1.msra.mxu0 0.0
    %901 = vmatprep.subr.mxu0 0.0
    %902 = vmatpush1.msra.mxu0 0.0
    %903 = vmatprep.subr.mxu0 0.0
    %904 = vmatpush1.msra.mxu0 0.0
    %905 = vmatprep.subr.mxu0 0.0
    %906 = vmatpush1.msra.mxu0 0.0
    %907 = vmatprep.subr.mxu0 0.0
    %908 = vmatpush1.msra.mxu0 0.0
    %909 = vmatprep.subr.mxu0 0.0
    %910 = vmatpush1.msra.mxu0 0.0
    %911 = vmatprep.subr.mxu0 0.0
    %912 = vmatpush1.msra.mxu0 0.0
    %913 = vmatprep.subr.mxu0 0.0
    %914 = vmatpush1.msra.mxu0 0.0
    %915 = vmatprep.subr.mxu0 0.0
    %916 = vmatpush1.msra.mxu0 0.0
    %917 = vmatprep.subr.mxu0 0.0
    %918 = vmatpush1.msra.mxu0 0.0
    %919 = vmatprep.subr.mxu0 0.0
    %920 = vmatpush1.msra.mxu0 0.0
    %921 = vmatprep.subr.mxu0 0.0
    %922 = vmatpush1.msra.mxu0 0.0
    %923 = vmatprep.subr.mxu0 0.0
    %924 = vmatpush1.msra.mxu0 0.0
    %925 = vmatprep.subr.mxu0 0.0
    %926 = vmatpush1.msra.mxu0 0.0
    %927 = vmatprep.subr.mxu0 0.0
    %928 = vmatpush1.msra.mxu0 0.0
    %929 = vmatprep.subr.mxu0 0.0
    %930 = vmatpush1.msra.mxu0 0.0
    %931 = vmatprep.subr.mxu0 0.0
    %932 = vmatpush1.msra.mxu0 0.0
    %933 = vmatprep.subr.mxu0 0.0
    %934 = vmatpush1.msra.mxu0 0.0
    %935 = vmatprep.subr.mxu0 0.0
    %936 = vmatpush1.msra.mxu0 0.0
    %937 = vmatprep.subr.mxu0 0.0
    %938 = vmatpush1.msra.mxu0 0.0
    %939 = vmatprep.subr.mxu0 0.0
    %940 = vmatpush1.msra.mxu0 0.0
    %941 = vmatprep.subr.mxu0 0.0
    %942 = vmatpush1.msra.mxu0 0.0
    %943 = vmatprep.mubr.f32.mxu0 0.0
    %944 = vmatmul.mubr.f32.gmra.mrb[0].mxu0 %v877
    %v945 = vpop.f32.mrb[0].mxu0
    %v946 = vadd.f32 0.0, %v945
    %v947 = vpop.f32.mrb[0].mxu0
    %948 = vdwg.mxu0
    %v949 = vadd.f32 %v873, %v946
    %v950 = vxor.u32 %v949, 2147483648
    %v951 = vmul.f32 %v950, 1.442695
    %v952 = vpow.pop %v951
    %v953 = vadd.f32 %v952, 1.0
    %v954 = vrcp.pop %v953
    %v955 = vmul.f32 1.0, %v954
    %v956 = vtanh.pop %v949
    %v957 = vsel %vm250, %v956, %v955
    %v958 = vmul.f32 %v957, %v865
    %960 = vrot.lane.b32.xlu0 %v957, 64
    %v961 = vpop.permute.xlu0 %960
    %v963 = vmul.f32 %v957, %v961
    %965 = vrot.lane.b32.xlu0 %v963, 32
    %v966 = vpop.permute.xlu0 %965
    %v968 = vadd.f32 %v958, %v966
    %v969 = vtanh.pop %v968
    %971 = vrot.lane.b32.xlu0 %v969, 64
    %v972 = vpop.permute.xlu0 %971
    %v974 = vmul.f32 %v957, %v972
    %s975 = scalar_lea.vmem [#allocation2], 56
    %v976 = vld [vmem:[%s975] sm:$0xff]
    %978 = vrot.lane.b32.xlu0 %v974, 32
    %v979 = vpop.permute.xlu0 %978
    %v980 = vsel %vm98, %v979, 0
    %982 = vmatprep.subr.mxu0 0.0
    %983 = vmatpush1.msra.mxu0 %v242
    %984 = vmatprep.subr.mxu0 0.0
    %985 = vmatpush1.msra.mxu0 %v243
    %986 = vmatprep.subr.mxu0 0.0
    %987 = vmatpush1.msra.mxu0 %v244
    %988 = vmatprep.subr.mxu0 0.0
    %989 = vmatpush1.msra.mxu0 %v245
    %990 = vmatprep.subr.mxu0 0.0
    %991 = vmatpush1.msra.mxu0 0.0
    %992 = vmatprep.subr.mxu0 0.0
    %993 = vmatpush1.msra.mxu0 0.0
    %994 = vmatprep.subr.mxu0 0.0
    %995 = vmatpush1.msra.mxu0 0.0
    %996 = vmatprep.subr.mxu0 0.0
    %997 = vmatpush1.msra.mxu0 0.0
    %998 = vmatprep.subr.mxu0 0.0
    %999 = vmatpush1.msra.mxu0 0.0
    %1000 = vmatprep.subr.mxu0 0.0
    %1001 = vmatpush1.msra.mxu0 0.0
    %1002 = vmatprep.subr.mxu0 0.0
    %1003 = vmatpush1.msra.mxu0 0.0
    %1004 = vmatprep.subr.mxu0 0.0
    %1005 = vmatpush1.msra.mxu0 0.0
    %1006 = vmatprep.subr.mxu0 0.0
    %1007 = vmatpush1.msra.mxu0 0.0
    %1008 = vmatprep.subr.mxu0 0.0
    %1009 = vmatpush1.msra.mxu0 0.0
    %1010 = vmatprep.subr.mxu0 0.0
    %1011 = vmatpush1.msra.mxu0 0.0
    %1012 = vmatprep.subr.mxu0 0.0
    %1013 = vmatpush1.msra.mxu0 0.0
    %1014 = vmatprep.subr.mxu0 0.0
    %1015 = vmatpush1.msra.mxu0 0.0
    %1016 = vmatprep.subr.mxu0 0.0
    %1017 = vmatpush1.msra.mxu0 0.0
    %1018 = vmatprep.subr.mxu0 0.0
    %1019 = vmatpush1.msra.mxu0 0.0
    %1020 = vmatprep.subr.mxu0 0.0
    %1021 = vmatpush1.msra.mxu0 0.0
    %1022 = vmatprep.subr.mxu0 0.0
    %1023 = vmatpush1.msra.mxu0 0.0
    %1024 = vmatprep.subr.mxu0 0.0
    %1025 = vmatpush1.msra.mxu0 0.0
    %1026 = vmatprep.subr.mxu0 0.0
    %1027 = vmatpush1.msra.mxu0 0.0
    %1028 = vmatprep.subr.mxu0 0.0
    %1029 = vmatpush1.msra.mxu0 0.0
    %1030 = vmatprep.subr.mxu0 0.0
    %1031 = vmatpush1.msra.mxu0 0.0
    %1032 = vmatprep.subr.mxu0 0.0
    %1033 = vmatpush1.msra.mxu0 0.0
    %1034 = vmatprep.subr.mxu0 0.0
    %1035 = vmatpush1.msra.mxu0 0.0
    %1036 = vmatprep.subr.mxu0 0.0
    %1037 = vmatpush1.msra.mxu0 0.0
    %1038 = vmatprep.subr.mxu0 0.0
    %1039 = vmatpush1.msra.mxu0 0.0
    %1040 = vmatprep.subr.mxu0 0.0
    %1041 = vmatpush1.msra.mxu0 0.0
    %1042 = vmatprep.subr.mxu0 0.0
    %1043 = vmatpush1.msra.mxu0 0.0
    %1044 = vmatprep.subr.mxu0 0.0
    %1045 = vmatpush1.msra.mxu0 0.0
    %1046 = vmatprep.mubr.f32.mxu0 0.0
    %1047 = vmatmul.mubr.f32.gmra.mrb[0].mxu0 %v980
    %v1048 = vpop.f32.mrb[0].mxu0
    %v1049 = vadd.f32 0.0, %v1048
    %v1050 = vpop.f32.mrb[0].mxu0
    %1051 = vdwg.mxu0
    %v1052 = vadd.f32 %v976, %v1049
    %v1053 = vxor.u32 %v1052, 2147483648
    %v1054 = vmul.f32 %v1053, 1.442695
    %v1055 = vpow.pop %v1054
    %v1056 = vadd.f32 %v1055, 1.0
    %v1057 = vrcp.pop %v1056
    %v1058 = vmul.f32 1.0, %v1057
    %v1059 = vtanh.pop %v1052
    %v1060 = vsel %vm250, %v1059, %v1058
    %v1061 = vmul.f32 %v1060, %v968
    %1063 = vrot.lane.b32.xlu0 %v1060, 64
    %v1064 = vpop.permute.xlu0 %1063
    %v1066 = vmul.f32 %v1060, %v1064
    %1068 = vrot.lane.b32.xlu0 %v1066, 32
    %v1069 = vpop.permute.xlu0 %1068
    %v1071 = vadd.f32 %v1061, %v1069
    %v1072 = vtanh.pop %v1071
    %1074 = vrot.lane.b32.xlu0 %v1072, 64
    %v1075 = vpop.permute.xlu0 %1074
    %v1077 = vmul.f32 %v1060, %v1075
    %1079 = vrot.lane.b32.xlu0 %v1077, 32
    %v1080 = vpop.permute.xlu0 %1079
    %1082 = vst.msk [vmem:[#allocation3] sm:$0xff] %vm98, %v1080
    %1084 = vrot.lane.b32.xlu0 %v1071, 96
    %v1085 = vpop.permute.xlu0 %1084
    %1087 = vst.msk [vmem:[#allocation4] sm:$0xff] %vm98, %v1085
    // Predicated region
    $region46: #{tpu_custom_call.1} parent=1 // pred_check
      %p1088 = pneg %p236
    $region47: #{tpu_custom_call.1} parent=1 // pred_check_branch
      %1090 = sbr.rel (%p1088) target = $region49
    $region48: #{tpu_custom_call.1} parent=1 // pred_region
      %v1091 = vld [vmem:[#allocation11] sm:$0xff]
      %v1092 = vld [vmem:[#allocation11 + $0x8] sm:$0xff]
      %v1093 = vld [vmem:[#allocation11 + $0x10] sm:$0xff]
      %v1094 = vld [vmem:[#allocation11 + $0x18] sm:$0xff]
      %v1095 = vld [vmem:[%s5] sm:$0x1]
      %v1097 = vlaneseq
      %v1098 = vshrl.u32 %v1097, 7
      %v1099 = vsub.s32 0, %v1098
      %v1100 = vrot.slane %v1095, %v1099
      %v1102 = vsel %vm98, %v1080, 0
      %1104 = vmatprep.subr.mxu0 0.0
      %1105 = vmatpush1.msra.mxu0 %v1091
      %1106 = vmatprep.subr.mxu0 0.0
      %1107 = vmatpush1.msra.mxu0 %v1092
      %1108 = vmatprep.subr.mxu0 0.0
      %1109 = vmatpush1.msra.mxu0 %v1093
      %1110 = vmatprep.subr.mxu0 0.0
      %1111 = vmatpush1.msra.mxu0 %v1094
      %1112 = vmatprep.subr.mxu0 0.0
      %1113 = vmatpush1.msra.mxu0 0.0
      %1114 = vmatprep.subr.mxu0 0.0
      %1115 = vmatpush1.msra.mxu0 0.0
      %1116 = vmatprep.subr.mxu0 0.0
      %1117 = vmatpush1.msra.mxu0 0.0
      %1118 = vmatprep.subr.mxu0 0.0
      %1119 = vmatpush1.msra.mxu0 0.0
      %1120 = vmatprep.subr.mxu0 0.0
      %1121 = vmatpush1.msra.mxu0 0.0
      %1122 = vmatprep.subr.mxu0 0.0
      %1123 = vmatpush1.msra.mxu0 0.0
      %1124 = vmatprep.subr.mxu0 0.0
      %1125 = vmatpush1.msra.mxu0 0.0
      %1126 = vmatprep.subr.mxu0 0.0
      %1127 = vmatpush1.msra.mxu0 0.0
      %1128 = vmatprep.subr.mxu0 0.0
      %1129 = vmatpush1.msra.mxu0 0.0
      %1130 = vmatprep.subr.mxu0 0.0
      %1131 = vmatpush1.msra.mxu0 0.0
      %1132 = vmatprep.subr.mxu0 0.0
      %1133 = vmatpush1.msra.mxu0 0.0
      %1134 = vmatprep.subr.mxu0 0.0
      %1135 = vmatpush1.msra.mxu0 0.0
      %1136 = vmatprep.subr.mxu0 0.0
      %1137 = vmatpush1.msra.mxu0 0.0
      %1138 = vmatprep.subr.mxu0 0.0
      %1139 = vmatpush1.msra.mxu0 0.0
      %1140 = vmatprep.subr.mxu0 0.0
      %1141 = vmatpush1.msra.mxu0 0.0
      %1142 = vmatprep.subr.mxu0 0.0
      %1143 = vmatpush1.msra.mxu0 0.0
      %1144 = vmatprep.subr.mxu0 0.0
      %1145 = vmatpush1.msra.mxu0 0.0
      %1146 = vmatprep.subr.mxu0 0.0
      %1147 = vmatpush1.msra.mxu0 0.0
      %1148 = vmatprep.subr.mxu0 0.0
      %1149 = vmatpush1.msra.mxu0 0.0
      %1150 = vmatprep.subr.mxu0 0.0
      %1151 = vmatpush1.msra.mxu0 0.0
      %1152 = vmatprep.subr.mxu0 0.0
      %1153 = vmatpush1.msra.mxu0 0.0
      %1154 = vmatprep.subr.mxu0 0.0
      %1155 = vmatpush1.msra.mxu0 0.0
      %1156 = vmatprep.subr.mxu0 0.0
      %1157 = vmatpush1.msra.mxu0 0.0
      %1158 = vmatprep.subr.mxu0 0.0
      %1159 = vmatpush1.msra.mxu0 0.0
      %1160 = vmatprep.subr.mxu0 0.0
      %1161 = vmatpush1.msra.mxu0 0.0
      %1162 = vmatprep.subr.mxu0 0.0
      %1163 = vmatpush1.msra.mxu0 0.0
      %1164 = vmatprep.subr.mxu0 0.0
      %1165 = vmatpush1.msra.mxu0 0.0
      %1166 = vmatprep.subr.mxu0 0.0
      %1167 = vmatpush1.msra.mxu0 0.0
      %1168 = vmatprep.mubr.f32.mxu0 0.0
      %1169 = vmatmul.mubr.f32.gmra.mrb[0].mxu0 %v1102
      %v1170 = vpop.f32.mrb[0].mxu0
      %v1171 = vadd.f32 %v1100, %v1170
      %v1172 = vpop.f32.mrb[0].mxu0
      %1173 = vdwg.mxu0
      %1174 = vst [vmem:[#allocation13] sm:$0xff] %v1171
    $region49: #{tpu_custom_call.1} parent=1 // pred_fallthru
      _
    // Predicated region
    $region50: #{tpu_custom_call.1} parent=1 // pred_check
      _
    $region51: #{tpu_custom_call.1} parent=1 // pred_check_branch
      %1176 = sbr.rel (0) target = $region53
    $region52: #{tpu_custom_call.1} parent=1 // pred_region
      %s1178 = ssub.s32 128, 128
      %1179 = vsyncadd [#allocation7], %s1178
      %s1181 = sshll.u32 [#allocation13], 4
      %s1182 = int_to_ptr.vmem [resolvable:$true] %s1181
      %1184 = dma.vmem_to_hbm [thread:$0]  %s1182, 128, %s6, [#allocation7]
    $region53: #{tpu_custom_call.1} parent=1 // pred_fallthru
      _
    // Predicated region
    $region54: #{tpu_custom_call.1} parent=1 // pred_check
      _
    $region55: #{tpu_custom_call.1} parent=1 // pred_check_branch
      %1186 = sbr.rel (0) target = $region57
    $region56: #{tpu_custom_call.1} parent=1 // pred_region
      %1187 = dma.done [#allocation7], 128
    $region57: #{tpu_custom_call.1} parent=1 // pred_fallthru
      _
    %1188 = vsyncpa [#allocation6], 1
    %1189 = vsyncpa [#allocation9], 1
    %1190 = vsyncpa [#allocation12], 1
    %1191 = vsyncpa [#allocation7], 1

</llo_original>
